<compile_context>
chip_gen: v7x
topology: tpu7x:2x2x1
jax: 0.10.0
libtpu: 0.0.40
codegen_flags: <defaults>
</compile_context>

<pallas_src>
import functools

import jax
import jax.numpy as jnp
from jax.experimental import pallas as pl
from jax.experimental.pallas import tpu as pltpu


def _round_up(n, m):
    return ((n + m - 1) // m) * m


# --------------------------------------------------------------------------
# Fused Pallas kernel: all LSTM layers (wavefront order) + FC head, one call.
# --------------------------------------------------------------------------
def _make_fused_kernel(T, B_pad, H, num_layers):
    """Ref order: x2d, wih0, whh0, b0, [w_cat_l, b_l]*(L-1), fc_w, fc_b, out, gx_scr."""
    G = 4 * H

    def kernel(*refs):
        x_ref, wih0_ref, whh0_ref, b0_ref = refs[0], refs[1], refs[2], refs[3]
        upper = [(refs[4 + 2 * l], refs[5 + 2 * l]) for l in range(num_layers - 1)]
        base = 4 + 2 * (num_layers - 1)
        fc_w_ref = refs[base]
        fc_b_ref = refs[base + 1]
        out_ref = refs[base + 2]
        gx_ref = refs[base + 3]

        f32 = jnp.float32

        # ---- Hoisted layer-0 input projection: one (T*B_pad, F_pad)@(F_pad, 4H)
        # matmul, off the serial chain.  Every per-step read below is a full
        # (8,128)-aligned tile (B_pad is a multiple of 8, 4H a multiple of 128).
        gx_ref[...] = (
            jnp.dot(x_ref[...], wih0_ref[...], preferred_element_type=f32)
            + b0_ref[...]
        )

        # Per-lane activation select (i/f/o -> sigmoid, g -> tanh), hoisted.
        lane = jax.lax.broadcasted_iota(jnp.int32, (B_pad, G), 1)
        is_g = (lane >= 2 * H) & (lane < 3 * H)

        # Loop-invariant bias broadcasts (avoid per-step broadcast_in_dim).
        upper_bias = [jnp.broadcast_to(b_ref[...], (B_pad, G)) for _, b_ref in upper]

        zero = jnp.zeros((B_pad, G), f32)
        h = [zero] * num_layers   # wide state; real h lives in lanes [H:2H]
        c = [zero] * num_layers   # real c lives in lanes [H:2H]

        def lstm_cell(gates, c_prev):
            # Full-width activation: 2 EUP passes over the whole gate block.
            act = jnp.where(is_g, jnp.tanh(gates), jax.nn.sigmoid(gates))
            # Half-width rotation (shift == 2H of 4H): identical result for
            # either roll direction.  Brings o onto q1 ([H:2H]) and g onto q0.
            act_r2 = pltpu.roll(act, 2 * H, axis=1)
            # i*g appears in BOTH q0 and q2, so rolling by H lands i*g on q1
            # regardless of roll direction.
            ig_pair = act * act_r2
            ig_q1 = pltpu.roll(ig_pair, H, axis=1)
            # Lanes [H:2H]: c' = f*c + i*g ; h' = o*tanh(c').  Other lanes hold
            # bounded garbage that the zero-padded weight rows discard.
            c_new = act * c_prev + ig_q1
            h_new = act_r2 * jnp.tanh(c_new)
            return h_new, c_new

        # ---- Wavefront over (layer, time): at step s, layer l runs t = s - l.
        # Layers are visited top-down so h[l-1] still holds layer l-1 @ t.
        # TODO(synk): for T beyond ~64 switch this static unroll to
        #             lax.fori_loop(..., unroll=True) to bound live ranges.
        for s in range(T + num_layers - 1):
            for l in range(num_layers - 1, -1, -1):
                t = s - l
                if t < 0 or t >= T:
                    continue
                if l == 0:
                    gates = gx_ref[t * B_pad:(t + 1) * B_pad, :] + jnp.dot(
                        h[0], whh0_ref[...], preferred_element_type=f32)
                else:
                    w_cat_ref, _ = upper[l - 1]
                    inp = jnp.concatenate([h[l - 1], h[l]], axis=-1)  # (B_pad, 8H)
                    gates = jnp.dot(inp, w_cat_ref[...],
                                    preferred_element_type=f32) + upper_bias[l - 1]
                h[l], c[l] = lstm_cell(gates, c[l])

        # ---- Fused FC head (eval-mode Dropout == identity).  fc_w rows are
        # zero-padded so the wide top-layer h is used directly; the store is a
        # full lane-dense (B_pad, HZ_pad) tile (padding sliced off in wrapper).
        out_ref[...] = (
            jnp.dot(h[num_layers - 1], fc_w_ref[...], preferred_element_type=f32)
            + fc_b_ref[...]
        )

    return kernel


# --------------------------------------------------------------------------
# One-time parameter packing (hoisted out of the per-call wrapper)
# --------------------------------------------------------------------------
def prepare_params(params, n_feats, hidden, num_layers, horizon):
    """Transpose / zero-pad / combine biases once.  The real hidden state lives
    in lanes [H:2H] of the wide (4H) state, so every weight that consumes h has
    its rows placed at [H:2H] (rest zero)."""
    H = hidden
    G = 4 * H
    F_pad = _round_up(max(n_feats, 1), 128)
    HZ_pad = _round_up(max(horizon, 1), 128)
    f32 = jnp.float32

    p0 = params["lstm"][0]
    wih0 = jnp.zeros((F_pad, G), f32).at[:n_feats, :].set(
        jnp.transpose(p0["w_ih"]).astype(f32))
    whh0 = jnp.zeros((G, G), f32).at[H:2 * H, :].set(
        jnp.transpose(p0["w_hh"]).astype(f32))
    b0 = (p0["b_ih"] + p0["b_hh"]).reshape(1, G).astype(f32)

    w_cats, b_uppers = [], []
    for l in range(1, num_layers):
        p = params["lstm"][l]
        w_cat = jnp.zeros((2 * G, G), f32)
        # rows [H:2H]       multiply the layer-below wide h  (W_ih)
        w_cat = w_cat.at[H:2 * H, :].set(jnp.transpose(p["w_ih"]).astype(f32))
        # rows [G+H:G+2H]   multiply this layer's wide h     (W_hh)
        w_cat = w_cat.at[G + H:G + 2 * H, :].set(jnp.transpose(p["w_hh"]).astype(f32))
        w_cats.append(w_cat)
        b_uppers.append((p["b_ih"] + p["b_hh"]).reshape(1, G).astype(f32))

    fc_w = jnp.zeros((G, HZ_pad), f32).at[H:2 * H, :horizon].set(
        jnp.transpose(params["fc_w"]).astype(f32))
    fc_b = jnp.zeros((1, HZ_pad), f32).at[:, :horizon].set(
        params["fc_b"].astype(f32))

    return {"wih0": wih0, "whh0": whh0, "b0": b0,
            "w_cat": w_cats, "b_upper": b_uppers,
            "fc_w": fc_w, "fc_b": fc_b}


# --------------------------------------------------------------------------
# Wrapper
# --------------------------------------------------------------------------
@functools.partial(jax.jit, static_argnames=("hidden", "num_layers", "horizon"))
def lstm_forecaster_forward(x_btF, packed, *, hidden, num_layers, horizon):
    """Forward pass matching LSTMForecaster.forward (inference mode).
    x_btF: (B, T, n_feats), batch-first like PyTorch."""
    assert num_layers >= 1
    x = x_btF.astype(jnp.float32)
    B, T, F = x.shape
    H = hidden
    G = 4 * H
    B_pad = _round_up(max(B, 1), 8)        # sublane-aligned per-step tiles
    F_pad = packed["wih0"].shape[0]
    HZ_pad = packed["fc_w"].shape[1]

    # Time-major, batch/feature zero-padded, flattened to (T*B_pad, F_pad);
    # rows [t*B_pad:(t+1)*B_pad] hold timestep t (8-row aligned).
    x_p = jnp.zeros((T, B_pad, F_pad), jnp.float32)
    x_p = x_p.at[:, :B, :F].set(jnp.transpose(x, (1, 0, 2)))
    x2d = x_p.reshape(T * B_pad, F_pad)

    inputs = [x2d, packed["wih0"], packed["whh0"], packed["b0"]]
    for l in range(num_layers - 1):
        inputs.append(packed["w_cat"][l])
        inputs.append(packed["b_upper"][l])
    inputs.append(packed["fc_w"])
    inputs.append(packed["fc_b"])

    kernel = _make_fused_kernel(T, B_pad, H, num_layers)

    out_pad = pl.pallas_call(
        kernel,
        out_shape=jax.ShapeDtypeStruct((B_pad, HZ_pad), jnp.float32),
        scratch_shapes=[pltpu.VMEM((T * B_pad, G), jnp.float32)],  # hoisted gate inputs
        compiler_params=pltpu.CompilerParams(vmem_limit_bytes=16 * 1024 * 1024),
    )(*inputs)
    return out_pad[:B, :horizon]


# --------------------------------------------------------------------------
# Deterministic parameter init (PyTorch-style uniform(-1/sqrt(H), 1/sqrt(H)))
# --------------------------------------------------------------------------
def init_params(key, n_feats, hidden, num_layers, horizon):
    bound = 1.0 / jnp.sqrt(jnp.float32(hidden))
    lstm_layers = []
    for layer in range(num_layers):
        in_dim = n_feats if layer == 0 else hidden
        key, k1, k2, k3, k4 = jax.random.split(key, 5)
        lstm_layers.append(
            dict(
                w_ih=jax.random.uniform(k1, (4 * hidden, in_dim), jnp.float32, -bound, bound),
                w_hh=jax.random.uniform(k2, (4 * hidden, hidden), jnp.float32, -bound, bound),
                b_ih=jax.random.uniform(k3, (4 * hidden,), jnp.float32, -bound, bound),
                b_hh=jax.random.uniform(k4, (4 * hidden,), jnp.float32, -bound, bound),
            )
        )
    key, k5, k6 = jax.random.split(key, 3)
    fc_w = jax.random.uniform(k5, (horizon, hidden), jnp.float32, -bound, bound)
    fc_b = jax.random.uniform(k6, (horizon,), jnp.float32, -bound, bound)
    return {"lstm": lstm_layers, "fc_w": fc_w, "fc_b": fc_b}


# --------------------------------------------------------------------------
# Pure-JAX reference for sanity checking
# --------------------------------------------------------------------------
def reference_forward(x_btF, params, hidden, num_layers):
    B, T, _ = x_btF.shape
    layer_in = x_btF.astype(jnp.float32)
    for layer in range(num_layers):
        p = params["lstm"][layer]
        h = jnp.zeros((B, hidden), jnp.float32)
        c = jnp.zeros((B, hidden), jnp.float32)
        outs = []
        for t in range(T):
            g = layer_in[:, t] @ p["w_ih"].T + h @ p["w_hh"].T + p["b_ih"] + p["b_hh"]
            i_g = jax.nn.sigmoid(g[:, 0 * hidden:1 * hidden])
            f_g = jax.nn.sigmoid(g[:, 1 * hidden:2 * hidden])
            g_g = jnp.tanh(g[:, 2 * hidden:3 * hidden])
            o_g = jax.nn.sigmoid(g[:, 3 * hidden:4 * hidden])
            c = f_g * c + i_g * g_g
            h = o_g * jnp.tanh(c)
            outs.append(h)
        layer_in = jnp.stack(outs, axis=1)  # (B, T, H)
    h_last = layer_in[:, -1]
    return h_last @ params["fc_w"].T + params["fc_b"]


# --------------------------------------------------------------------------
if __name__ == "__main__":
    B, T = 2, 8            # batch, sequence length
    n_feats = 4
    hidden = 32
    num_layers = 2
    horizon = 8

    key = jax.random.PRNGKey(0)
    key, kx, kp = jax.random.split(key, 3)
    x = jax.random.normal(kx, (B, T, n_feats), dtype=jnp.float32)
    params = init_params(kp, n_feats, hidden, num_layers, horizon)

    # One-time packing (transposes, zero-padding, bias combine) -- not per call.
    packed = prepare_params(params, n_feats, hidden, num_layers, horizon)

    out = lstm_forecaster_forward(
        x, packed, hidden=hidden, num_layers=num_layers, horizon=horizon)
    out = jax.block_until_ready(out)

    ref = reference_forward(x, params, hidden, num_layers)
    assert out.shape == (B, horizon), out.shape
    assert jnp.allclose(out, ref, atol=2e-4, rtol=2e-4), (
        "mismatch vs pure-JAX reference")

    print("KERNEL_OK")
</pallas_src>

<mosaic_0001>
module attributes {stable_mosaic.version = 11 : i64} {
  func.func @kernel(%arg0: memref<64x128xf32, #tpu.memory_space<vmem>>, %arg1: memref<128x128xf32, #tpu.memory_space<vmem>>, %arg2: memref<128x128xf32, #tpu.memory_space<vmem>>, %arg3: memref<1x128xf32, #tpu.memory_space<vmem>>, %arg4: memref<256x128xf32, #tpu.memory_space<vmem>>, %arg5: memref<1x128xf32, #tpu.memory_space<vmem>>, %arg6: memref<128x128xf32, #tpu.memory_space<vmem>>, %arg7: memref<1x128xf32, #tpu.memory_space<vmem>>, %arg8: memref<8x128xf32, #tpu.memory_space<vmem>>, %arg9: memref<64x128xf32, #tpu.memory_space<vmem>>) attributes {dimension_semantics = [], scalar_prefetch = 0 : i64, scratch_operands = 1 : i64, tpu.core_type = #tpu.core_type<tc>} {
    %c0 = arith.constant 0 : index
    %c0_0 = arith.constant 0 : index
    %0 = vector.load %arg0[%c0, %c0_0] : memref<64x128xf32, #tpu.memory_space<vmem>>, vector<64x128xf32>
    %c0_1 = arith.constant 0 : index
    %c0_2 = arith.constant 0 : index
    %1 = vector.load %arg1[%c0_1, %c0_2] : memref<128x128xf32, #tpu.memory_space<vmem>>, vector<128x128xf32>
    %cst = arith.constant dense<0.000000e+00> : vector<64x128xf32>
    %2 = tpu.matmul %0, %1, %cst {dimension_numbers = #tpu.dot_dimension_numbers<[1], [0], [0], [1], [0, 0, 1, 1], [], []>} : vector<64x128xf32>, vector<128x128xf32>, vector<64x128xf32> -> vector<64x128xf32>
    %c0_3 = arith.constant 0 : index
    %c0_4 = arith.constant 0 : index
    %3 = vector.load %arg3[%c0_3, %c0_4] : memref<1x128xf32, #tpu.memory_space<vmem>>, vector<1x128xf32>
    %4 = vector.broadcast %3 : vector<1x128xf32> to vector<64x128xf32>
    %5 = arith.addf %2, %4 : vector<64x128xf32>
    %c0_5 = arith.constant 0 : index
    %c0_6 = arith.constant 0 : index
    %6 = vector.load %arg9[%c0_5, %c0_6] : memref<64x128xf32, #tpu.memory_space<vmem>>, vector<64x128xf32>
    tpu.vector_store %arg9[%c0_5, %c0_6], %5 {strides = array<i32>} : memref<64x128xf32, #tpu.memory_space<vmem>>, vector<64x128xf32>,
    %7 = tpu.iota {dimensions = array<i32: 1>} : vector<8x128xi32>
    %c64_i32 = arith.constant 64 : i32
    %8 = vector.broadcast %c64_i32 : i32 to vector<8x128xi32>
    %9 = arith.cmpi sge, %7, %8 : vector<8x128xi32>
    %c96_i32 = arith.constant 96 : i32
    %10 = vector.broadcast %c96_i32 : i32 to vector<8x128xi32>
    %11 = arith.cmpi slt, %7, %10 : vector<8x128xi32>
    %12 = arith.andi %9, %11 : vector<8x128xi1>
    %c0_7 = arith.constant 0 : index
    %c0_8 = arith.constant 0 : index
    %13 = vector.load %arg5[%c0_7, %c0_8] : memref<1x128xf32, #tpu.memory_space<vmem>>, vector<1x128xf32>
    %14 = vector.shape_cast %13 : vector<1x128xf32> to vector<1x128xf32>
    %15 = vector.broadcast %14 : vector<1x128xf32> to vector<8x128xf32>
    %cst_9 = arith.constant 0.000000e+00 : f32
    %16 = vector.broadcast %cst_9 : f32 to vector<8x128xf32>
    %c0_10 = arith.constant 0 : index
    %c0_11 = arith.constant 0 : index
    %17 = vector.load %arg9[%c0_10, %c0_11] : memref<64x128xf32, #tpu.memory_space<vmem>>, vector<8x128xf32>
    %c0_12 = arith.constant 0 : index
    %c0_13 = arith.constant 0 : index
    %18 = vector.load %arg2[%c0_12, %c0_13] : memref<128x128xf32, #tpu.memory_space<vmem>>, vector<128x128xf32>
    %cst_14 = arith.constant dense<0.000000e+00> : vector<8x128xf32>
    %19 = tpu.matmul %16, %18, %cst_14 {dimension_numbers = #tpu.dot_dimension_numbers<[1], [0], [0], [1], [0, 0, 1, 1], [], []>} : vector<8x128xf32>, vector<128x128xf32>, vector<8x128xf32> -> vector<8x128xf32>
    %20 = arith.addf %17, %19 : vector<8x128xf32>
    %21 = math.tanh %20 : vector<8x128xf32>
    %22 = arith.negf %20 : vector<8x128xf32>
    %23 = math.exp %22 : vector<8x128xf32>
    %cst_15 = arith.constant 1.000000e+00 : f32
    %24 = vector.broadcast %cst_15 : f32 to vector<8x128xf32>
    %25 = arith.addf %24, %23 : vector<8x128xf32>
    %26 = arith.divf %24, %25 : vector<8x128xf32>
    %27 = arith.select %12, %21, %26 : vector<8x128xi1>, vector<8x128xf32>
    %c64_i32_16 = arith.constant 64 : i32
    %28 = tpu.dynamic_rotate %27 by %c64_i32_16 dim 1 : vector<8x128xf32>, i32 -> vector<8x128xf32>
    %29 = arith.mulf %27, %28 : vector<8x128xf32>
    %c32_i32 = arith.constant 32 : i32
    %30 = tpu.dynamic_rotate %29 by %c32_i32 dim 1 : vector<8x128xf32>, i32 -> vector<8x128xf32>
    %31 = arith.mulf %27, %16 : vector<8x128xf32>
    %32 = arith.addf %31, %30 : vector<8x128xf32>
    %33 = math.tanh %32 : vector<8x128xf32>
    %34 = arith.mulf %28, %33 : vector<8x128xf32>
    %35 = tpu.concatenate %34, %16 in 1 : vector<8x128xf32>, vector<8x128xf32> -> vector<8x256xf32>
    %c0_17 = arith.constant 0 : index
    %c0_18 = arith.constant 0 : index
    %36 = vector.load %arg4[%c0_17, %c0_18] : memref<256x128xf32, #tpu.memory_space<vmem>>, vector<256x128xf32>
    %cst_19 = arith.constant dense<0.000000e+00> : vector<8x128xf32>
    %37 = tpu.matmul %35, %36, %cst_19 {dimension_numbers = #tpu.dot_dimension_numbers<[1], [0], [0], [1], [0, 0, 1, 1], [], []>} : vector<8x256xf32>, vector<256x128xf32>, vector<8x128xf32> -> vector<8x128xf32>
    %38 = arith.addf %37, %15 : vector<8x128xf32>
    %39 = math.tanh %38 : vector<8x128xf32>
    %40 = arith.negf %38 : vector<8x128xf32>
    %41 = math.exp %40 : vector<8x128xf32>
    %cst_20 = arith.constant 1.000000e+00 : f32
    %42 = vector.broadcast %cst_20 : f32 to vector<8x128xf32>
    %43 = arith.addf %42, %41 : vector<8x128xf32>
    %44 = arith.divf %42, %43 : vector<8x128xf32>
    %45 = arith.select %12, %39, %44 : vector<8x128xi1>, vector<8x128xf32>
    %c64_i32_21 = arith.constant 64 : i32
    %46 = tpu.dynamic_rotate %45 by %c64_i32_21 dim 1 : vector<8x128xf32>, i32 -> vector<8x128xf32>
    %47 = arith.mulf %45, %46 : vector<8x128xf32>
    %c32_i32_22 = arith.constant 32 : i32
    %48 = tpu.dynamic_rotate %47 by %c32_i32_22 dim 1 : vector<8x128xf32>, i32 -> vector<8x128xf32>
    %49 = arith.mulf %45, %16 : vector<8x128xf32>
    %50 = arith.addf %49, %48 : vector<8x128xf32>
    %51 = math.tanh %50 : vector<8x128xf32>
    %52 = arith.mulf %46, %51 : vector<8x128xf32>
    %c8 = arith.constant 8 : index
    %c0_23 = arith.constant 0 : index
    %53 = vector.load %arg9[%c8, %c0_23] : memref<64x128xf32, #tpu.memory_space<vmem>>, vector<8x128xf32>
    %c0_24 = arith.constant 0 : index
    %c0_25 = arith.constant 0 : index
    %54 = vector.load %arg2[%c0_24, %c0_25] : memref<128x128xf32, #tpu.memory_space<vmem>>, vector<128x128xf32>
    %cst_26 = arith.constant dense<0.000000e+00> : vector<8x128xf32>
    %55 = tpu.matmul %34, %54, %cst_26 {dimension_numbers = #tpu.dot_dimension_numbers<[1], [0], [0], [1], [0, 0, 1, 1], [], []>} : vector<8x128xf32>, vector<128x128xf32>, vector<8x128xf32> -> vector<8x128xf32>
    %56 = arith.addf %53, %55 : vector<8x128xf32>
    %57 = math.tanh %56 : vector<8x128xf32>
    %58 = arith.negf %56 : vector<8x128xf32>
    %59 = math.exp %58 : vector<8x128xf32>
    %cst_27 = arith.constant 1.000000e+00 : f32
    %60 = vector.broadcast %cst_27 : f32 to vector<8x128xf32>
    %61 = arith.addf %60, %59 : vector<8x128xf32>
    %62 = arith.divf %60, %61 : vector<8x128xf32>
    %63 = arith.select %12, %57, %62 : vector<8x128xi1>, vector<8x128xf32>
    %c64_i32_28 = arith.constant 64 : i32
    %64 = tpu.dynamic_rotate %63 by %c64_i32_28 dim 1 : vector<8x128xf32>, i32 -> vector<8x128xf32>
    %65 = arith.mulf %63, %64 : vector<8x128xf32>
    %c32_i32_29 = arith.constant 32 : i32
    %66 = tpu.dynamic_rotate %65 by %c32_i32_29 dim 1 : vector<8x128xf32>, i32 -> vector<8x128xf32>
    %67 = arith.mulf %63, %32 : vector<8x128xf32>
    %68 = arith.addf %67, %66 : vector<8x128xf32>
    %69 = math.tanh %68 : vector<8x128xf32>
    %70 = arith.mulf %64, %69 : vector<8x128xf32>
    %71 = tpu.concatenate %70, %52 in 1 : vector<8x128xf32>, vector<8x128xf32> -> vector<8x256xf32>
    %c0_30 = arith.constant 0 : index
    %c0_31 = arith.constant 0 : index
    %72 = vector.load %arg4[%c0_30, %c0_31] : memref<256x128xf32, #tpu.memory_space<vmem>>, vector<256x128xf32>
    %cst_32 = arith.constant dense<0.000000e+00> : vector<8x128xf32>
    %73 = tpu.matmul %71, %72, %cst_32 {dimension_numbers = #tpu.dot_dimension_numbers<[1], [0], [0], [1], [0, 0, 1, 1], [], []>} : vector<8x256xf32>, vector<256x128xf32>, vector<8x128xf32> -> vector<8x128xf32>
    %74 = arith.addf %73, %15 : vector<8x128xf32>
    %75 = math.tanh %74 : vector<8x128xf32>
    %76 = arith.negf %74 : vector<8x128xf32>
    %77 = math.exp %76 : vector<8x128xf32>
    %cst_33 = arith.constant 1.000000e+00 : f32
    %78 = vector.broadcast %cst_33 : f32 to vector<8x128xf32>
    %79 = arith.addf %78, %77 : vector<8x128xf32>
    %80 = arith.divf %78, %79 : vector<8x128xf32>
    %81 = arith.select %12, %75, %80 : vector<8x128xi1>, vector<8x128xf32>
    %c64_i32_34 = arith.constant 64 : i32
    %82 = tpu.dynamic_rotate %81 by %c64_i32_34 dim 1 : vector<8x128xf32>, i32 -> vector<8x128xf32>
    %83 = arith.mulf %81, %82 : vector<8x128xf32>
    %c32_i32_35 = arith.constant 32 : i32
    %84 = tpu.dynamic_rotate %83 by %c32_i32_35 dim 1 : vector<8x128xf32>, i32 -> vector<8x128xf32>
    %85 = arith.mulf %81, %50 : vector<8x128xf32>
    %86 = arith.addf %85, %84 : vector<8x128xf32>
    %87 = math.tanh %86 : vector<8x128xf32>
    %88 = arith.mulf %82, %87 : vector<8x128xf32>
    %c16 = arith.constant 16 : index
    %c0_36 = arith.constant 0 : index
    %89 = vector.load %arg9[%c16, %c0_36] : memref<64x128xf32, #tpu.memory_space<vmem>>, vector<8x128xf32>
    %c0_37 = arith.constant 0 : index
    %c0_38 = arith.constant 0 : index
    %90 = vector.load %arg2[%c0_37, %c0_38] : memref<128x128xf32, #tpu.memory_space<vmem>>, vector<128x128xf32>
    %cst_39 = arith.constant dense<0.000000e+00> : vector<8x128xf32>
    %91 = tpu.matmul %70, %90, %cst_39 {dimension_numbers = #tpu.dot_dimension_numbers<[1], [0], [0], [1], [0, 0, 1, 1], [], []>} : vector<8x128xf32>, vector<128x128xf32>, vector<8x128xf32> -> vector<8x128xf32>
    %92 = arith.addf %89, %91 : vector<8x128xf32>
    %93 = math.tanh %92 : vector<8x128xf32>
    %94 = arith.negf %92 : vector<8x128xf32>
    %95 = math.exp %94 : vector<8x128xf32>
    %cst_40 = arith.constant 1.000000e+00 : f32
    %96 = vector.broadcast %cst_40 : f32 to vector<8x128xf32>
    %97 = arith.addf %96, %95 : vector<8x128xf32>
    %98 = arith.divf %96, %97 : vector<8x128xf32>
    %99 = arith.select %12, %93, %98 : vector<8x128xi1>, vector<8x128xf32>
    %c64_i32_41 = arith.constant 64 : i32
    %100 = tpu.dynamic_rotate %99 by %c64_i32_41 dim 1 : vector<8x128xf32>, i32 -> vector<8x128xf32>
    %101 = arith.mulf %99, %100 : vector<8x128xf32>
    %c32_i32_42 = arith.constant 32 : i32
    %102 = tpu.dynamic_rotate %101 by %c32_i32_42 dim 1 : vector<8x128xf32>, i32 -> vector<8x128xf32>
    %103 = arith.mulf %99, %68 : vector<8x128xf32>
    %104 = arith.addf %103, %102 : vector<8x128xf32>
    %105 = math.tanh %104 : vector<8x128xf32>
    %106 = arith.mulf %100, %105 : vector<8x128xf32>
    %107 = tpu.concatenate %106, %88 in 1 : vector<8x128xf32>, vector<8x128xf32> -> vector<8x256xf32>
    %c0_43 = arith.constant 0 : index
    %c0_44 = arith.constant 0 : index
    %108 = vector.load %arg4[%c0_43, %c0_44] : memref<256x128xf32, #tpu.memory_space<vmem>>, vector<256x128xf32>
    %cst_45 = arith.constant dense<0.000000e+00> : vector<8x128xf32>
    %109 = tpu.matmul %107, %108, %cst_45 {dimension_numbers = #tpu.dot_dimension_numbers<[1], [0], [0], [1], [0, 0, 1, 1], [], []>} : vector<8x256xf32>, vector<256x128xf32>, vector<8x128xf32> -> vector<8x128xf32>
    %110 = arith.addf %109, %15 : vector<8x128xf32>
    %111 = math.tanh %110 : vector<8x128xf32>
    %112 = arith.negf %110 : vector<8x128xf32>
    %113 = math.exp %112 : vector<8x128xf32>
    %cst_46 = arith.constant 1.000000e+00 : f32
    %114 = vector.broadcast %cst_46 : f32 to vector<8x128xf32>
    %115 = arith.addf %114, %113 : vector<8x128xf32>
    %116 = arith.divf %114, %115 : vector<8x128xf32>
    %117 = arith.select %12, %111, %116 : vector<8x128xi1>, vector<8x128xf32>
    %c64_i32_47 = arith.constant 64 : i32
    %118 = tpu.dynamic_rotate %117 by %c64_i32_47 dim 1 : vector<8x128xf32>, i32 -> vector<8x128xf32>
    %119 = arith.mulf %117, %118 : vector<8x128xf32>
    %c32_i32_48 = arith.constant 32 : i32
    %120 = tpu.dynamic_rotate %119 by %c32_i32_48 dim 1 : vector<8x128xf32>, i32 -> vector<8x128xf32>
    %121 = arith.mulf %117, %86 : vector<8x128xf32>
    %122 = arith.addf %121, %120 : vector<8x128xf32>
    %123 = math.tanh %122 : vector<8x128xf32>
    %124 = arith.mulf %118, %123 : vector<8x128xf32>
    %c24 = arith.constant 24 : index
    %c0_49 = arith.constant 0 : index
    %125 = vector.load %arg9[%c24, %c0_49] : memref<64x128xf32, #tpu.memory_space<vmem>>, vector<8x128xf32>
    %c0_50 = arith.constant 0 : index
    %c0_51 = arith.constant 0 : index
    %126 = vector.load %arg2[%c0_50, %c0_51] : memref<128x128xf32, #tpu.memory_space<vmem>>, vector<128x128xf32>
    %cst_52 = arith.constant dense<0.000000e+00> : vector<8x128xf32>
    %127 = tpu.matmul %106, %126, %cst_52 {dimension_numbers = #tpu.dot_dimension_numbers<[1], [0], [0], [1], [0, 0, 1, 1], [], []>} : vector<8x128xf32>, vector<128x128xf32>, vector<8x128xf32> -> vector<8x128xf32>
    %128 = arith.addf %125, %127 : vector<8x128xf32>
    %129 = math.tanh %128 : vector<8x128xf32>
    %130 = arith.negf %128 : vector<8x128xf32>
    %131 = math.exp %130 : vector<8x128xf32>
    %cst_53 = arith.constant 1.000000e+00 : f32
    %132 = vector.broadcast %cst_53 : f32 to vector<8x128xf32>
    %133 = arith.addf %132, %131 : vector<8x128xf32>
    %134 = arith.divf %132, %133 : vector<8x128xf32>
    %135 = arith.select %12, %129, %134 : vector<8x128xi1>, vector<8x128xf32>
    %c64_i32_54 = arith.constant 64 : i32
    %136 = tpu.dynamic_rotate %135 by %c64_i32_54 dim 1 : vector<8x128xf32>, i32 -> vector<8x128xf32>
    %137 = arith.mulf %135, %136 : vector<8x128xf32>
    %c32_i32_55 = arith.constant 32 : i32
    %138 = tpu.dynamic_rotate %137 by %c32_i32_55 dim 1 : vector<8x128xf32>, i32 -> vector<8x128xf32>
    %139 = arith.mulf %135, %104 : vector<8x128xf32>
    %140 = arith.addf %139, %138 : vector<8x128xf32>
    %141 = math.tanh %140 : vector<8x128xf32>
    %142 = arith.mulf %136, %141 : vector<8x128xf32>
    %143 = tpu.concatenate %142, %124 in 1 : vector<8x128xf32>, vector<8x128xf32> -> vector<8x256xf32>
    %c0_56 = arith.constant 0 : index
    %c0_57 = arith.constant 0 : index
    %144 = vector.load %arg4[%c0_56, %c0_57] : memref<256x128xf32, #tpu.memory_space<vmem>>, vector<256x128xf32>
    %cst_58 = arith.constant dense<0.000000e+00> : vector<8x128xf32>
    %145 = tpu.matmul %143, %144, %cst_58 {dimension_numbers = #tpu.dot_dimension_numbers<[1], [0], [0], [1], [0, 0, 1, 1], [], []>} : vector<8x256xf32>, vector<256x128xf32>, vector<8x128xf32> -> vector<8x128xf32>
    %146 = arith.addf %145, %15 : vector<8x128xf32>
    %147 = math.tanh %146 : vector<8x128xf32>
    %148 = arith.negf %146 : vector<8x128xf32>
    %149 = math.exp %148 : vector<8x128xf32>
    %cst_59 = arith.constant 1.000000e+00 : f32
    %150 = vector.broadcast %cst_59 : f32 to vector<8x128xf32>
    %151 = arith.addf %150, %149 : vector<8x128xf32>
    %152 = arith.divf %150, %151 : vector<8x128xf32>
    %153 = arith.select %12, %147, %152 : vector<8x128xi1>, vector<8x128xf32>
    %c64_i32_60 = arith.constant 64 : i32
    %154 = tpu.dynamic_rotate %153 by %c64_i32_60 dim 1 : vector<8x128xf32>, i32 -> vector<8x128xf32>
    %155 = arith.mulf %153, %154 : vector<8x128xf32>
    %c32_i32_61 = arith.constant 32 : i32
    %156 = tpu.dynamic_rotate %155 by %c32_i32_61 dim 1 : vector<8x128xf32>, i32 -> vector<8x128xf32>
    %157 = arith.mulf %153, %122 : vector<8x128xf32>
    %158 = arith.addf %157, %156 : vector<8x128xf32>
    %159 = math.tanh %158 : vector<8x128xf32>
    %160 = arith.mulf %154, %159 : vector<8x128xf32>
    %c32 = arith.constant 32 : index
    %c0_62 = arith.constant 0 : index
    %161 = vector.load %arg9[%c32, %c0_62] : memref<64x128xf32, #tpu.memory_space<vmem>>, vector<8x128xf32>
    %c0_63 = arith.constant 0 : index
    %c0_64 = arith.constant 0 : index
    %162 = vector.load %arg2[%c0_63, %c0_64] : memref<128x128xf32, #tpu.memory_space<vmem>>, vector<128x128xf32>
    %cst_65 = arith.constant dense<0.000000e+00> : vector<8x128xf32>
    %163 = tpu.matmul %142, %162, %cst_65 {dimension_numbers = #tpu.dot_dimension_numbers<[1], [0], [0], [1], [0, 0, 1, 1], [], []>} : vector<8x128xf32>, vector<128x128xf32>, vector<8x128xf32> -> vector<8x128xf32>
    %164 = arith.addf %161, %163 : vector<8x128xf32>
    %165 = math.tanh %164 : vector<8x128xf32>
    %166 = arith.negf %164 : vector<8x128xf32>
    %167 = math.exp %166 : vector<8x128xf32>
    %cst_66 = arith.constant 1.000000e+00 : f32
    %168 = vector.broadcast %cst_66 : f32 to vector<8x128xf32>
    %169 = arith.addf %168, %167 : vector<8x128xf32>
    %170 = arith.divf %168, %169 : vector<8x128xf32>
    %171 = arith.select %12, %165, %170 : vector<8x128xi1>, vector<8x128xf32>
    %c64_i32_67 = arith.constant 64 : i32
    %172 = tpu.dynamic_rotate %171 by %c64_i32_67 dim 1 : vector<8x128xf32>, i32 -> vector<8x128xf32>
    %173 = arith.mulf %171, %172 : vector<8x128xf32>
    %c32_i32_68 = arith.constant 32 : i32
    %174 = tpu.dynamic_rotate %173 by %c32_i32_68 dim 1 : vector<8x128xf32>, i32 -> vector<8x128xf32>
    %175 = arith.mulf %171, %140 : vector<8x128xf32>
    %176 = arith.addf %175, %174 : vector<8x128xf32>
    %177 = math.tanh %176 : vector<8x128xf32>
    %178 = arith.mulf %172, %177 : vector<8x128xf32>
    %179 = tpu.concatenate %178, %160 in 1 : vector<8x128xf32>, vector<8x128xf32> -> vector<8x256xf32>
    %c0_69 = arith.constant 0 : index
    %c0_70 = arith.constant 0 : index
    %180 = vector.load %arg4[%c0_69, %c0_70] : memref<256x128xf32, #tpu.memory_space<vmem>>, vector<256x128xf32>
    %cst_71 = arith.constant dense<0.000000e+00> : vector<8x128xf32>
    %181 = tpu.matmul %179, %180, %cst_71 {dimension_numbers = #tpu.dot_dimension_numbers<[1], [0], [0], [1], [0, 0, 1, 1], [], []>} : vector<8x256xf32>, vector<256x128xf32>, vector<8x128xf32> -> vector<8x128xf32>
    %182 = arith.addf %181, %15 : vector<8x128xf32>
    %183 = math.tanh %182 : vector<8x128xf32>
    %184 = arith.negf %182 : vector<8x128xf32>
    %185 = math.exp %184 : vector<8x128xf32>
    %cst_72 = arith.constant 1.000000e+00 : f32
    %186 = vector.broadcast %cst_72 : f32 to vector<8x128xf32>
    %187 = arith.addf %186, %185 : vector<8x128xf32>
    %188 = arith.divf %186, %187 : vector<8x128xf32>
    %189 = arith.select %12, %183, %188 : vector<8x128xi1>, vector<8x128xf32>
    %c64_i32_73 = arith.constant 64 : i32
    %190 = tpu.dynamic_rotate %189 by %c64_i32_73 dim 1 : vector<8x128xf32>, i32 -> vector<8x128xf32>
    %191 = arith.mulf %189, %190 : vector<8x128xf32>
    %c32_i32_74 = arith.constant 32 : i32
    %192 = tpu.dynamic_rotate %191 by %c32_i32_74 dim 1 : vector<8x128xf32>, i32 -> vector<8x128xf32>
    %193 = arith.mulf %189, %158 : vector<8x128xf32>
    %194 = arith.addf %193, %192 : vector<8x128xf32>
    %195 = math.tanh %194 : vector<8x128xf32>
    %196 = arith.mulf %190, %195 : vector<8x128xf32>
    %c40 = arith.constant 40 : index
    %c0_75 = arith.constant 0 : index
    %197 = vector.load %arg9[%c40, %c0_75] : memref<64x128xf32, #tpu.memory_space<vmem>>, vector<8x128xf32>
    %c0_76 = arith.constant 0 : index
    %c0_77 = arith.constant 0 : index
    %198 = vector.load %arg2[%c0_76, %c0_77] : memref<128x128xf32, #tpu.memory_space<vmem>>, vector<128x128xf32>
    %cst_78 = arith.constant dense<0.000000e+00> : vector<8x128xf32>
    %199 = tpu.matmul %178, %198, %cst_78 {dimension_numbers = #tpu.dot_dimension_numbers<[1], [0], [0], [1], [0, 0, 1, 1], [], []>} : vector<8x128xf32>, vector<128x128xf32>, vector<8x128xf32> -> vector<8x128xf32>
    %200 = arith.addf %197, %199 : vector<8x128xf32>
    %201 = math.tanh %200 : vector<8x128xf32>
    %202 = arith.negf %200 : vector<8x128xf32>
    %203 = math.exp %202 : vector<8x128xf32>
    %cst_79 = arith.constant 1.000000e+00 : f32
    %204 = vector.broadcast %cst_79 : f32 to vector<8x128xf32>
    %205 = arith.addf %204, %203 : vector<8x128xf32>
    %206 = arith.divf %204, %205 : vector<8x128xf32>
    %207 = arith.select %12, %201, %206 : vector<8x128xi1>, vector<8x128xf32>
    %c64_i32_80 = arith.constant 64 : i32
    %208 = tpu.dynamic_rotate %207 by %c64_i32_80 dim 1 : vector<8x128xf32>, i32 -> vector<8x128xf32>
    %209 = arith.mulf %207, %208 : vector<8x128xf32>
    %c32_i32_81 = arith.constant 32 : i32
    %210 = tpu.dynamic_rotate %209 by %c32_i32_81 dim 1 : vector<8x128xf32>, i32 -> vector<8x128xf32>
    %211 = arith.mulf %207, %176 : vector<8x128xf32>
    %212 = arith.addf %211, %210 : vector<8x128xf32>
    %213 = math.tanh %212 : vector<8x128xf32>
    %214 = arith.mulf %208, %213 : vector<8x128xf32>
    %215 = tpu.concatenate %214, %196 in 1 : vector<8x128xf32>, vector<8x128xf32> -> vector<8x256xf32>
    %c0_82 = arith.constant 0 : index
    %c0_83 = arith.constant 0 : index
    %216 = vector.load %arg4[%c0_82, %c0_83] : memref<256x128xf32, #tpu.memory_space<vmem>>, vector<256x128xf32>
    %cst_84 = arith.constant dense<0.000000e+00> : vector<8x128xf32>
    %217 = tpu.matmul %215, %216, %cst_84 {dimension_numbers = #tpu.dot_dimension_numbers<[1], [0], [0], [1], [0, 0, 1, 1], [], []>} : vector<8x256xf32>, vector<256x128xf32>, vector<8x128xf32> -> vector<8x128xf32>
    %218 = arith.addf %217, %15 : vector<8x128xf32>
    %219 = math.tanh %218 : vector<8x128xf32>
    %220 = arith.negf %218 : vector<8x128xf32>
    %221 = math.exp %220 : vector<8x128xf32>
    %cst_85 = arith.constant 1.000000e+00 : f32
    %222 = vector.broadcast %cst_85 : f32 to vector<8x128xf32>
    %223 = arith.addf %222, %221 : vector<8x128xf32>
    %224 = arith.divf %222, %223 : vector<8x128xf32>
    %225 = arith.select %12, %219, %224 : vector<8x128xi1>, vector<8x128xf32>
    %c64_i32_86 = arith.constant 64 : i32
    %226 = tpu.dynamic_rotate %225 by %c64_i32_86 dim 1 : vector<8x128xf32>, i32 -> vector<8x128xf32>
    %227 = arith.mulf %225, %226 : vector<8x128xf32>
    %c32_i32_87 = arith.constant 32 : i32
    %228 = tpu.dynamic_rotate %227 by %c32_i32_87 dim 1 : vector<8x128xf32>, i32 -> vector<8x128xf32>
    %229 = arith.mulf %225, %194 : vector<8x128xf32>
    %230 = arith.addf %229, %228 : vector<8x128xf32>
    %231 = math.tanh %230 : vector<8x128xf32>
    %232 = arith.mulf %226, %231 : vector<8x128xf32>
    %c48 = arith.constant 48 : index
    %c0_88 = arith.constant 0 : index
    %233 = vector.load %arg9[%c48, %c0_88] : memref<64x128xf32, #tpu.memory_space<vmem>>, vector<8x128xf32>
    %c0_89 = arith.constant 0 : index
    %c0_90 = arith.constant 0 : index
    %234 = vector.load %arg2[%c0_89, %c0_90] : memref<128x128xf32, #tpu.memory_space<vmem>>, vector<128x128xf32>
    %cst_91 = arith.constant dense<0.000000e+00> : vector<8x128xf32>
    %235 = tpu.matmul %214, %234, %cst_91 {dimension_numbers = #tpu.dot_dimension_numbers<[1], [0], [0], [1], [0, 0, 1, 1], [], []>} : vector<8x128xf32>, vector<128x128xf32>, vector<8x128xf32> -> vector<8x128xf32>
    %236 = arith.addf %233, %235 : vector<8x128xf32>
    %237 = math.tanh %236 : vector<8x128xf32>
    %238 = arith.negf %236 : vector<8x128xf32>
    %239 = math.exp %238 : vector<8x128xf32>
    %cst_92 = arith.constant 1.000000e+00 : f32
    %240 = vector.broadcast %cst_92 : f32 to vector<8x128xf32>
    %241 = arith.addf %240, %239 : vector<8x128xf32>
    %242 = arith.divf %240, %241 : vector<8x128xf32>
    %243 = arith.select %12, %237, %242 : vector<8x128xi1>, vector<8x128xf32>
    %c64_i32_93 = arith.constant 64 : i32
    %244 = tpu.dynamic_rotate %243 by %c64_i32_93 dim 1 : vector<8x128xf32>, i32 -> vector<8x128xf32>
    %245 = arith.mulf %243, %244 : vector<8x128xf32>
    %c32_i32_94 = arith.constant 32 : i32
    %246 = tpu.dynamic_rotate %245 by %c32_i32_94 dim 1 : vector<8x128xf32>, i32 -> vector<8x128xf32>
    %247 = arith.mulf %243, %212 : vector<8x128xf32>
    %248 = arith.addf %247, %246 : vector<8x128xf32>
    %249 = math.tanh %248 : vector<8x128xf32>
    %250 = arith.mulf %244, %249 : vector<8x128xf32>
    %251 = tpu.concatenate %250, %232 in 1 : vector<8x128xf32>, vector<8x128xf32> -> vector<8x256xf32>
    %c0_95 = arith.constant 0 : index
    %c0_96 = arith.constant 0 : index
    %252 = vector.load %arg4[%c0_95, %c0_96] : memref<256x128xf32, #tpu.memory_space<vmem>>, vector<256x128xf32>
    %cst_97 = arith.constant dense<0.000000e+00> : vector<8x128xf32>
    %253 = tpu.matmul %251, %252, %cst_97 {dimension_numbers = #tpu.dot_dimension_numbers<[1], [0], [0], [1], [0, 0, 1, 1], [], []>} : vector<8x256xf32>, vector<256x128xf32>, vector<8x128xf32> -> vector<8x128xf32>
    %254 = arith.addf %253, %15 : vector<8x128xf32>
    %255 = math.tanh %254 : vector<8x128xf32>
    %256 = arith.negf %254 : vector<8x128xf32>
    %257 = math.exp %256 : vector<8x128xf32>
    %cst_98 = arith.constant 1.000000e+00 : f32
    %258 = vector.broadcast %cst_98 : f32 to vector<8x128xf32>
    %259 = arith.addf %258, %257 : vector<8x128xf32>
    %260 = arith.divf %258, %259 : vector<8x128xf32>
    %261 = arith.select %12, %255, %260 : vector<8x128xi1>, vector<8x128xf32>
    %c64_i32_99 = arith.constant 64 : i32
    %262 = tpu.dynamic_rotate %261 by %c64_i32_99 dim 1 : vector<8x128xf32>, i32 -> vector<8x128xf32>
    %263 = arith.mulf %261, %262 : vector<8x128xf32>
    %c32_i32_100 = arith.constant 32 : i32
    %264 = tpu.dynamic_rotate %263 by %c32_i32_100 dim 1 : vector<8x128xf32>, i32 -> vector<8x128xf32>
    %265 = arith.mulf %261, %230 : vector<8x128xf32>
    %266 = arith.addf %265, %264 : vector<8x128xf32>
    %267 = math.tanh %266 : vector<8x128xf32>
    %268 = arith.mulf %262, %267 : vector<8x128xf32>
    %c56 = arith.constant 56 : index
    %c0_101 = arith.constant 0 : index
    %269 = vector.load %arg9[%c56, %c0_101] : memref<64x128xf32, #tpu.memory_space<vmem>>, vector<8x128xf32>
    %c0_102 = arith.constant 0 : index
    %c0_103 = arith.constant 0 : index
    %270 = vector.load %arg2[%c0_102, %c0_103] : memref<128x128xf32, #tpu.memory_space<vmem>>, vector<128x128xf32>
    %cst_104 = arith.constant dense<0.000000e+00> : vector<8x128xf32>
    %271 = tpu.matmul %250, %270, %cst_104 {dimension_numbers = #tpu.dot_dimension_numbers<[1], [0], [0], [1], [0, 0, 1, 1], [], []>} : vector<8x128xf32>, vector<128x128xf32>, vector<8x128xf32> -> vector<8x128xf32>
    %272 = arith.addf %269, %271 : vector<8x128xf32>
    %273 = math.tanh %272 : vector<8x128xf32>
    %274 = arith.negf %272 : vector<8x128xf32>
    %275 = math.exp %274 : vector<8x128xf32>
    %cst_105 = arith.constant 1.000000e+00 : f32
    %276 = vector.broadcast %cst_105 : f32 to vector<8x128xf32>
    %277 = arith.addf %276, %275 : vector<8x128xf32>
    %278 = arith.divf %276, %277 : vector<8x128xf32>
    %279 = arith.select %12, %273, %278 : vector<8x128xi1>, vector<8x128xf32>
    %c64_i32_106 = arith.constant 64 : i32
    %280 = tpu.dynamic_rotate %279 by %c64_i32_106 dim 1 : vector<8x128xf32>, i32 -> vector<8x128xf32>
    %281 = arith.mulf %279, %280 : vector<8x128xf32>
    %c32_i32_107 = arith.constant 32 : i32
    %282 = tpu.dynamic_rotate %281 by %c32_i32_107 dim 1 : vector<8x128xf32>, i32 -> vector<8x128xf32>
    %283 = arith.mulf %279, %248 : vector<8x128xf32>
    %284 = arith.addf %283, %282 : vector<8x128xf32>
    %285 = math.tanh %284 : vector<8x128xf32>
    %286 = arith.mulf %280, %285 : vector<8x128xf32>
    %287 = tpu.concatenate %286, %268 in 1 : vector<8x128xf32>, vector<8x128xf32> -> vector<8x256xf32>
    %c0_108 = arith.constant 0 : index
    %c0_109 = arith.constant 0 : index
    %288 = vector.load %arg4[%c0_108, %c0_109] : memref<256x128xf32, #tpu.memory_space<vmem>>, vector<256x128xf32>
    %cst_110 = arith.constant dense<0.000000e+00> : vector<8x128xf32>
    %289 = tpu.matmul %287, %288, %cst_110 {dimension_numbers = #tpu.dot_dimension_numbers<[1], [0], [0], [1], [0, 0, 1, 1], [], []>} : vector<8x256xf32>, vector<256x128xf32>, vector<8x128xf32> -> vector<8x128xf32>
    %290 = arith.addf %289, %15 : vector<8x128xf32>
    %291 = math.tanh %290 : vector<8x128xf32>
    %292 = arith.negf %290 : vector<8x128xf32>
    %293 = math.exp %292 : vector<8x128xf32>
    %cst_111 = arith.constant 1.000000e+00 : f32
    %294 = vector.broadcast %cst_111 : f32 to vector<8x128xf32>
    %295 = arith.addf %294, %293 : vector<8x128xf32>
    %296 = arith.divf %294, %295 : vector<8x128xf32>
    %297 = arith.select %12, %291, %296 : vector<8x128xi1>, vector<8x128xf32>
    %c64_i32_112 = arith.constant 64 : i32
    %298 = tpu.dynamic_rotate %297 by %c64_i32_112 dim 1 : vector<8x128xf32>, i32 -> vector<8x128xf32>
    %299 = arith.mulf %297, %298 : vector<8x128xf32>
    %c32_i32_113 = arith.constant 32 : i32
    %300 = tpu.dynamic_rotate %299 by %c32_i32_113 dim 1 : vector<8x128xf32>, i32 -> vector<8x128xf32>
    %301 = arith.mulf %297, %266 : vector<8x128xf32>
    %302 = arith.addf %301, %300 : vector<8x128xf32>
    %303 = math.tanh %302 : vector<8x128xf32>
    %304 = arith.mulf %298, %303 : vector<8x128xf32>
    %c0_114 = arith.constant 0 : index
    %c0_115 = arith.constant 0 : index
    %305 = vector.load %arg6[%c0_114, %c0_115] : memref<128x128xf32, #tpu.memory_space<vmem>>, vector<128x128xf32>
    %cst_116 = arith.constant dense<0.000000e+00> : vector<8x128xf32>
    %306 = tpu.matmul %304, %305, %cst_116 {dimension_numbers = #tpu.dot_dimension_numbers<[1], [0], [0], [1], [0, 0, 1, 1], [], []>} : vector<8x128xf32>, vector<128x128xf32>, vector<8x128xf32> -> vector<8x128xf32>
    %c0_117 = arith.constant 0 : index
    %c0_118 = arith.constant 0 : index
    %307 = vector.load %arg7[%c0_117, %c0_118] : memref<1x128xf32, #tpu.memory_space<vmem>>, vector<1x128xf32>
    %308 = vector.broadcast %307 : vector<1x128xf32> to vector<8x128xf32>
    %309 = arith.addf %306, %308 : vector<8x128xf32>
    %c0_119 = arith.constant 0 : index
    %c0_120 = arith.constant 0 : index
    %310 = vector.load %arg8[%c0_119, %c0_120] : memref<8x128xf32, #tpu.memory_space<vmem>>, vector<8x128xf32>
    tpu.vector_store %arg8[%c0_119, %c0_120], %309 {strides = array<i32>} : memref<8x128xf32, #tpu.memory_space<vmem>>, vector<8x128xf32>,
    return
  }
}

</mosaic_0001>

<llo_original>
// kernel: lstm_forecaster_forward.1
$region0: #{lstm_forecaster_forward.1}
  #allocation0 [shape = 'u32[]', space=smem, size = 0x4, offset = 0x4, fixed_abs, tag = 'smem constant byte address 0x4 - core index']
  #allocation1 [shape = 'u32[144,128]{1,0:T(1,128)}', space=vmem, size = 0x12000, scoped, tag = 'internal scratch']
  #allocation2 [shape = 'f32[64,128]{1,0:T(8,128)}', space=vmem, size = 0x8000, scoped, tag = 'scratch operand']
  %s0 = inlined_call_operand.vmem [shape: f32[64,128], index: 0, kind: input, shape index: {}]
  %s1 = inlined_call_operand.vmem [shape: f32[128,128], index: 1, kind: input, shape index: {}]
  %s2 = inlined_call_operand.hbm [shape: f32[128,128], index: 2, kind: input, shape index: {}]
  %s3 = inlined_call_operand.vmem [shape: f32[1,128], index: 3, kind: input, shape index: {}]
  %s4 = inlined_call_operand.hbm [shape: f32[256,128], index: 4, kind: input, shape index: {}]
  %s5 = inlined_call_operand.vmem [shape: f32[1,128], index: 5, kind: input, shape index: {}]
  %s6 = inlined_call_operand.hbm [shape: f32[128,128], index: 6, kind: input, shape index: {}]
  %s7 = inlined_call_operand.vmem [shape: f32[1,128], index: 7, kind: input, shape index: {}]
  %s8 = inlined_call_operand.vmem [shape: f32[8,128], index: 8, kind: output, shape index: {}]
  %s9 = sld [smem:[#allocation0]]
  $region54: #{lstm_forecaster_forward.1} parent=0
    _
  %s11 = ssub.s32 1, %s9
  %s12 = scalar_select 0, %s11, %s9
  $region1: #{lstm_forecaster_forward.1} parent=0
    #allocation3 [shape = 'u8[65536]{0}', space=vmem, size = 0x10000, scoped, tag = 'input window, operand 2, single buffered']
    #allocation4 [shape = 's32[1]{0}', space=sflag, size = 0x4, scoped, tag = 'scoped memory for lstm_forecaster_forward.1']
    #allocation5 [shape = 'u8[131072]{0}', space=vmem, size = 0x20000, scoped, tag = 'input window, operand 4, single buffered']
    #allocation6 [shape = 's32[1]{0}', space=sflag, size = 0x4, scoped, tag = 'scoped memory for lstm_forecaster_forward.1']
    #allocation7 [shape = 'u8[65536]{0}', space=vmem, size = 0x10000, scoped, tag = 'input window, operand 6, single buffered']
    %13 = vsyncpa [#allocation4], 0
    %14 = vsyncpa [#allocation6], 0
    // Predicated region
    $region2: #{lstm_forecaster_forward.1} parent=1 // pred_check
      _
    $region3: #{lstm_forecaster_forward.1} parent=1 // pred_check_branch
      %16 = sbr.rel (0) target = $region5
    $region4: #{lstm_forecaster_forward.1} parent=1 // pred_region
      _
    $region5: #{lstm_forecaster_forward.1} parent=1 // pred_fallthru
      _
    // Predicated region
    $region6: #{lstm_forecaster_forward.1} parent=1 // pred_check
      _
    $region7: #{lstm_forecaster_forward.1} parent=1 // pred_check_branch
      %18 = sbr.rel (0) target = $region9
    $region8: #{lstm_forecaster_forward.1} parent=1 // pred_region
      _
    $region9: #{lstm_forecaster_forward.1} parent=1 // pred_fallthru
      _
    // Predicated region
    $region10: #{lstm_forecaster_forward.1} parent=1 // pred_check
      _
    $region11: #{lstm_forecaster_forward.1} parent=1 // pred_check_branch
      %20 = sbr.rel (0) target = $region13
    $region12: #{lstm_forecaster_forward.1} parent=1 // pred_region
      %s22 = ssub.s32 2048, 2048
      %23 = vsyncadd [#allocation4], %s22
      %s24 = sshll.u32 [#allocation3], 4
      %s25 = int_to_ptr.vmem [resolvable:$true] %s24
      %30 = dma.hbm_to_vmem [thread:$0]  %s2, 2048, %s25, [#allocation4], 128, 128, 8
    $region13: #{lstm_forecaster_forward.1} parent=1 // pred_fallthru
      _
    // Predicated region
    $region14: #{lstm_forecaster_forward.1} parent=1 // pred_check
      _
    $region15: #{lstm_forecaster_forward.1} parent=1 // pred_check_branch
      %32 = sbr.rel (0) target = $region17
    $region16: #{lstm_forecaster_forward.1} parent=1 // pred_region
      _
    $region17: #{lstm_forecaster_forward.1} parent=1 // pred_fallthru
      _
    // Predicated region
    $region18: #{lstm_forecaster_forward.1} parent=1 // pred_check
      _
    $region19: #{lstm_forecaster_forward.1} parent=1 // pred_check_branch
      %34 = sbr.rel (0) target = $region21
    $region20: #{lstm_forecaster_forward.1} parent=1 // pred_region
      %s36 = ssub.s32 4096, 4096
      %37 = vsyncadd [#allocation6], %s36
      %s38 = sshll.u32 [#allocation5], 4
      %s39 = int_to_ptr.vmem [resolvable:$true] %s38
      %44 = dma.hbm_to_vmem [thread:$0]  %s4, 4096, %s39, [#allocation6], 128, 128, 8
    $region21: #{lstm_forecaster_forward.1} parent=1 // pred_fallthru
      _
    // Predicated region
    $region22: #{lstm_forecaster_forward.1} parent=1 // pred_check
      _
    $region23: #{lstm_forecaster_forward.1} parent=1 // pred_check_branch
      %46 = sbr.rel (0) target = $region25
    $region24: #{lstm_forecaster_forward.1} parent=1 // pred_region
      _
    $region25: #{lstm_forecaster_forward.1} parent=1 // pred_fallthru
      _
    // Predicated region
    $region26: #{lstm_forecaster_forward.1} parent=1 // pred_check
      _
    $region27: #{lstm_forecaster_forward.1} parent=1 // pred_check_branch
      %48 = sbr.rel (0) target = $region29
    $region28: #{lstm_forecaster_forward.1} parent=1 // pred_region
      %s50 = ssub.s32 2048, 2048
      %51 = vsyncadd [#allocation6], %s50
      %s52 = sshll.u32 [#allocation7], 4
      %s53 = int_to_ptr.vmem [resolvable:$true] %s52
      %58 = dma.hbm_to_vmem [thread:$0]  %s6, 2048, %s53, [#allocation6], 128, 128, 8
    $region29: #{lstm_forecaster_forward.1} parent=1 // pred_fallthru
      _
    // Predicated region
    $region30: #{lstm_forecaster_forward.1} parent=1 // pred_check
      _
    $region31: #{lstm_forecaster_forward.1} parent=1 // pred_check_branch
      %60 = sbr.rel (0) target = $region33
    $region32: #{lstm_forecaster_forward.1} parent=1 // pred_region
      _
    $region33: #{lstm_forecaster_forward.1} parent=1 // pred_fallthru
      _
    // Predicated region
    $region34: #{lstm_forecaster_forward.1} parent=1 // pred_check
      _
    $region35: #{lstm_forecaster_forward.1} parent=1 // pred_check_branch
      %62 = sbr.rel (0) target = $region37
    $region36: #{lstm_forecaster_forward.1} parent=1 // pred_region
      %63 = dma.done [#allocation4], 2048
    $region37: #{lstm_forecaster_forward.1} parent=1 // pred_fallthru
      _
    // Predicated region
    $region38: #{lstm_forecaster_forward.1} parent=1 // pred_check
      _
    $region39: #{lstm_forecaster_forward.1} parent=1 // pred_check_branch
      %65 = sbr.rel (0) target = $region41
    $region40: #{lstm_forecaster_forward.1} parent=1 // pred_region
      %66 = dma.done [#allocation6], 4096
    $region41: #{lstm_forecaster_forward.1} parent=1 // pred_fallthru
      _
    // Predicated region
    $region42: #{lstm_forecaster_forward.1} parent=1 // pred_check
      _
    $region43: #{lstm_forecaster_forward.1} parent=1 // pred_check_branch
      %68 = sbr.rel (0) target = $region45
    $region44: #{lstm_forecaster_forward.1} parent=1 // pred_region
      %69 = dma.done [#allocation6], 2048
    $region45: #{lstm_forecaster_forward.1} parent=1 // pred_fallthru
      _
    %v70 = vld [vmem:[%s0] sm:$0xff]
    %v71 = vld [vmem:[%s0 + $0x8] sm:$0xff]
    %v72 = vld [vmem:[%s0 + $0x10] sm:$0xff]
    %v73 = vld [vmem:[%s0 + $0x18] sm:$0xff]
    %v74 = vld [vmem:[%s0 + $0x20] sm:$0xff]
    %v75 = vld [vmem:[%s0 + $0x28] sm:$0xff]
    %v76 = vld [vmem:[%s0 + $0x30] sm:$0xff]
    %v77 = vld [vmem:[%s0 + $0x38] sm:$0xff]
    %v78 = vld [vmem:[%s1] sm:$0xff]
    %v79 = vld [vmem:[%s1 + $0x8] sm:$0xff]
    %v80 = vld [vmem:[%s1 + $0x10] sm:$0xff]
    %v81 = vld [vmem:[%s1 + $0x18] sm:$0xff]
    %v82 = vld [vmem:[%s1 + $0x20] sm:$0xff]
    %v83 = vld [vmem:[%s1 + $0x28] sm:$0xff]
    %v84 = vld [vmem:[%s1 + $0x30] sm:$0xff]
    %v85 = vld [vmem:[%s1 + $0x38] sm:$0xff]
    %v86 = vld [vmem:[%s1 + $0x40] sm:$0xff]
    %v87 = vld [vmem:[%s1 + $0x48] sm:$0xff]
    %v88 = vld [vmem:[%s1 + $0x50] sm:$0xff]
    %v89 = vld [vmem:[%s1 + $0x58] sm:$0xff]
    %v90 = vld [vmem:[%s1 + $0x60] sm:$0xff]
    %v91 = vld [vmem:[%s1 + $0x68] sm:$0xff]
    %v92 = vld [vmem:[%s1 + $0x70] sm:$0xff]
    %v93 = vld [vmem:[%s1 + $0x78] sm:$0xff]
    %v94 = vld [vmem:[%s3] sm:$0x1]
    %v96 = vlaneseq
    %v97 = vshrl.u32 %v96, 7
    %v98 = vsub.s32 0, %v97
    %v99 = vrot.slane %v94, %v98
    %101 = vmatprep.subr.mxu0 0.0
    %102 = vmatpush1.msra.mxu0 %v78
    %103 = vmatprep.subr.mxu0 0.0
    %104 = vmatpush1.msra.mxu0 %v79
    %105 = vmatprep.subr.mxu0 0.0
    %106 = vmatpush1.msra.mxu0 %v80
    %107 = vmatprep.subr.mxu0 0.0
    %108 = vmatpush1.msra.mxu0 %v81
    %109 = vmatprep.subr.mxu0 0.0
    %110 = vmatpush1.msra.mxu0 %v82
    %111 = vmatprep.subr.mxu0 0.0
    %112 = vmatpush1.msra.mxu0 %v83
    %113 = vmatprep.subr.mxu0 0.0
    %114 = vmatpush1.msra.mxu0 %v84
    %115 = vmatprep.subr.mxu0 0.0
    %116 = vmatpush1.msra.mxu0 %v85
    %117 = vmatprep.subr.mxu0 0.0
    %118 = vmatpush1.msra.mxu0 %v86
    %119 = vmatprep.subr.mxu0 0.0
    %120 = vmatpush1.msra.mxu0 %v87
    %121 = vmatprep.subr.mxu0 0.0
    %122 = vmatpush1.msra.mxu0 %v88
    %123 = vmatprep.subr.mxu0 0.0
    %124 = vmatpush1.msra.mxu0 %v89
    %125 = vmatprep.subr.mxu0 0.0
    %126 = vmatpush1.msra.mxu0 %v90
    %127 = vmatprep.subr.mxu0 0.0
    %128 = vmatpush1.msra.mxu0 %v91
    %129 = vmatprep.subr.mxu0 0.0
    %130 = vmatpush1.msra.mxu0 %v92
    %131 = vmatprep.subr.mxu0 0.0
    %132 = vmatpush1.msra.mxu0 %v93
    %133 = vmatprep.subr.mxu0 0.0
    %134 = vmatpush1.msra.mxu0 0.0
    %135 = vmatprep.subr.mxu0 0.0
    %136 = vmatpush1.msra.mxu0 0.0
    %137 = vmatprep.subr.mxu0 0.0
    %138 = vmatpush1.msra.mxu0 0.0
    %139 = vmatprep.subr.mxu0 0.0
    %140 = vmatpush1.msra.mxu0 0.0
    %141 = vmatprep.subr.mxu0 0.0
    %142 = vmatpush1.msra.mxu0 0.0
    %143 = vmatprep.subr.mxu0 0.0
    %144 = vmatpush1.msra.mxu0 0.0
    %145 = vmatprep.subr.mxu0 0.0
    %146 = vmatpush1.msra.mxu0 0.0
    %147 = vmatprep.subr.mxu0 0.0
    %148 = vmatpush1.msra.mxu0 0.0
    %149 = vmatprep.subr.mxu0 0.0
    %150 = vmatpush1.msra.mxu0 0.0
    %151 = vmatprep.subr.mxu0 0.0
    %152 = vmatpush1.msra.mxu0 0.0
    %153 = vmatprep.subr.mxu0 0.0
    %154 = vmatpush1.msra.mxu0 0.0
    %155 = vmatprep.subr.mxu0 0.0
    %156 = vmatpush1.msra.mxu0 0.0
    %157 = vmatprep.subr.mxu0 0.0
    %158 = vmatpush1.msra.mxu0 0.0
    %159 = vmatprep.subr.mxu0 0.0
    %160 = vmatpush1.msra.mxu0 0.0
    %161 = vmatprep.subr.mxu0 0.0
    %162 = vmatpush1.msra.mxu0 0.0
    %163 = vmatprep.subr.mxu0 0.0
    %164 = vmatpush1.msra.mxu0 0.0
    %165 = vmatprep.mubr.f32.mxu0 0.0
    %166 = vmatmul.mubr.f32.gmra.mrb[0].mxu0 %v70
    %v167 = vpop.f32.mrb[0].mxu0
    %v168 = vadd.f32 %v99, %v167
    %v169 = vpop.f32.mrb[0].mxu0
    %170 = vmatprep.mubr.f32.mxu0 0.0
    %171 = vmatmul.mubr.f32.gmra.mrb[0].mxu0 %v71
    %v172 = vpop.f32.mrb[0].mxu0
    %v173 = vadd.f32 %v99, %v172
    %v174 = vpop.f32.mrb[0].mxu0
    %175 = vmatprep.mubr.f32.mxu0 0.0
    %176 = vmatmul.mubr.f32.gmra.mrb[0].mxu0 %v72
    %v177 = vpop.f32.mrb[0].mxu0
    %v178 = vadd.f32 %v99, %v177
    %v179 = vpop.f32.mrb[0].mxu0
    %180 = vmatprep.mubr.f32.mxu0 0.0
    %181 = vmatmul.mubr.f32.gmra.mrb[0].mxu0 %v73
    %v182 = vpop.f32.mrb[0].mxu0
    %v183 = vadd.f32 %v99, %v182
    %v184 = vpop.f32.mrb[0].mxu0
    %185 = vmatprep.mubr.f32.mxu0 0.0
    %186 = vmatmul.mubr.f32.gmra.mrb[0].mxu0 %v74
    %v187 = vpop.f32.mrb[0].mxu0
    %v188 = vadd.f32 %v99, %v187
    %v189 = vpop.f32.mrb[0].mxu0
    %190 = vmatprep.mubr.f32.mxu0 0.0
    %191 = vmatmul.mubr.f32.gmra.mrb[0].mxu0 %v75
    %v192 = vpop.f32.mrb[0].mxu0
    %v193 = vadd.f32 %v99, %v192
    %v194 = vpop.f32.mrb[0].mxu0
    %195 = vmatprep.mubr.f32.mxu0 0.0
    %196 = vmatmul.mubr.f32.gmra.mrb[0].mxu0 %v76
    %v197 = vpop.f32.mrb[0].mxu0
    %v198 = vadd.f32 %v99, %v197
    %v199 = vpop.f32.mrb[0].mxu0
    %200 = vmatprep.mubr.f32.mxu0 0.0
    %201 = vmatmul.mubr.f32.gmra.mrb[0].mxu0 %v77
    %v202 = vpop.f32.mrb[0].mxu0
    %v203 = vadd.f32 %v99, %v202
    %v204 = vpop.f32.mrb[0].mxu0
    %205 = vdwg.mxu0
    %206 = vst [vmem:[#allocation2] sm:$0xff] %v168
    %207 = vst [vmem:[#allocation2 + $0x8] sm:$0xff] %v173
    %208 = vst [vmem:[#allocation2 + $0x10] sm:$0xff] %v178
    %209 = vst [vmem:[#allocation2 + $0x18] sm:$0xff] %v183
    %210 = vst [vmem:[#allocation2 + $0x20] sm:$0xff] %v188
    %211 = vst [vmem:[#allocation2 + $0x28] sm:$0xff] %v193
    %212 = vst [vmem:[#allocation2 + $0x30] sm:$0xff] %v198
    %213 = vst [vmem:[#allocation2 + $0x38] sm:$0xff] %v203
    %v214 = vlaneseq
    %v215 = vand.u32 %v214, 127
    %vm216 = vcmp.ge.s32.totalorder %v215, 64
    %vm217 = vcmp.lt.s32.totalorder %v215, 96
    %vm218 = vmand %vm216, %vm217
    %v219 = vld [vmem:[%s5] sm:$0x1]
    %v221 = vlaneseq
    %v222 = vshrl.u32 %v221, 7
    %v223 = vsub.s32 0, %v222
    %v224 = vrot.slane %v219, %v223
    %v226 = vld [vmem:[#allocation2] sm:$0xff]
    %v227 = vld [vmem:[#allocation3] sm:$0xff]
    %v228 = vld [vmem:[#allocation3 + $0x8] sm:$0xff]
    %v229 = vld [vmem:[#allocation3 + $0x10] sm:$0xff]
    %v230 = vld [vmem:[#allocation3 + $0x18] sm:$0xff]
    %v231 = vld [vmem:[#allocation3 + $0x20] sm:$0xff]
    %v232 = vld [vmem:[#allocation3 + $0x28] sm:$0xff]
    %v233 = vld [vmem:[#allocation3 + $0x30] sm:$0xff]
    %v234 = vld [vmem:[#allocation3 + $0x38] sm:$0xff]
    %v235 = vld [vmem:[#allocation3 + $0x40] sm:$0xff]
    %v236 = vld [vmem:[#allocation3 + $0x48] sm:$0xff]
    %v237 = vld [vmem:[#allocation3 + $0x50] sm:$0xff]
    %v238 = vld [vmem:[#allocation3 + $0x58] sm:$0xff]
    %v239 = vld [vmem:[#allocation3 + $0x60] sm:$0xff]
    %v240 = vld [vmem:[#allocation3 + $0x68] sm:$0xff]
    %v241 = vld [vmem:[#allocation3 + $0x70] sm:$0xff]
    %v242 = vld [vmem:[#allocation3 + $0x78] sm:$0xff]
    %243 = vmatprep.subr.mxu0 0.0
    %244 = vmatpush1.msra.mxu0 %v227
    %245 = vmatprep.subr.mxu0 0.0
    %246 = vmatpush1.msra.mxu0 %v228
    %247 = vmatprep.subr.mxu0 0.0
    %248 = vmatpush1.msra.mxu0 %v229
    %249 = vmatprep.subr.mxu0 0.0
    %250 = vmatpush1.msra.mxu0 %v230
    %251 = vmatprep.subr.mxu0 0.0
    %252 = vmatpush1.msra.mxu0 %v231
    %253 = vmatprep.subr.mxu0 0.0
    %254 = vmatpush1.msra.mxu0 %v232
    %255 = vmatprep.subr.mxu0 0.0
    %256 = vmatpush1.msra.mxu0 %v233
    %257 = vmatprep.subr.mxu0 0.0
    %258 = vmatpush1.msra.mxu0 %v234
    %259 = vmatprep.subr.mxu0 0.0
    %260 = vmatpush1.msra.mxu0 %v235
    %261 = vmatprep.subr.mxu0 0.0
    %262 = vmatpush1.msra.mxu0 %v236
    %263 = vmatprep.subr.mxu0 0.0
    %264 = vmatpush1.msra.mxu0 %v237
    %265 = vmatprep.subr.mxu0 0.0
    %266 = vmatpush1.msra.mxu0 %v238
    %267 = vmatprep.subr.mxu0 0.0
    %268 = vmatpush1.msra.mxu0 %v239
    %269 = vmatprep.subr.mxu0 0.0
    %270 = vmatpush1.msra.mxu0 %v240
    %271 = vmatprep.subr.mxu0 0.0
    %272 = vmatpush1.msra.mxu0 %v241
    %273 = vmatprep.subr.mxu0 0.0
    %274 = vmatpush1.msra.mxu0 %v242
    %275 = vmatprep.subr.mxu0 0.0
    %276 = vmatpush1.msra.mxu0 0.0
    %277 = vmatprep.subr.mxu0 0.0
    %278 = vmatpush1.msra.mxu0 0.0
    %279 = vmatprep.subr.mxu0 0.0
    %280 = vmatpush1.msra.mxu0 0.0
    %281 = vmatprep.subr.mxu0 0.0
    %282 = vmatpush1.msra.mxu0 0.0
    %283 = vmatprep.subr.mxu0 0.0
    %284 = vmatpush1.msra.mxu0 0.0
    %285 = vmatprep.subr.mxu0 0.0
    %286 = vmatpush1.msra.mxu0 0.0
    %287 = vmatprep.subr.mxu0 0.0
    %288 = vmatpush1.msra.mxu0 0.0
    %289 = vmatprep.subr.mxu0 0.0
    %290 = vmatpush1.msra.mxu0 0.0
    %291 = vmatprep.subr.mxu0 0.0
    %292 = vmatpush1.msra.mxu0 0.0
    %293 = vmatprep.subr.mxu0 0.0
    %294 = vmatpush1.msra.mxu0 0.0
    %295 = vmatprep.subr.mxu0 0.0
    %296 = vmatpush1.msra.mxu0 0.0
    %297 = vmatprep.subr.mxu0 0.0
    %298 = vmatpush1.msra.mxu0 0.0
    %299 = vmatprep.subr.mxu0 0.0
    %300 = vmatpush1.msra.mxu0 0.0
    %301 = vmatprep.subr.mxu0 0.0
    %302 = vmatpush1.msra.mxu0 0.0
    %303 = vmatprep.subr.mxu0 0.0
    %304 = vmatpush1.msra.mxu0 0.0
    %305 = vmatprep.subr.mxu0 0.0
    %306 = vmatpush1.msra.mxu0 0.0
    %307 = vmatprep.mubr.f32.mxu0 0.0
    %308 = vmatmul.mubr.f32.gmra.mrb[0].mxu0 0.0
    %v309 = vpop.f32.mrb[0].mxu0
    %v310 = vadd.f32 0.0, %v309
    %v311 = vpop.f32.mrb[0].mxu0
    %312 = vdwg.mxu0
    %v313 = vadd.f32 %v226, %v310
    %v314 = vtanh.pop %v313
    %v315 = vxor.u32 %v313, 2147483648
    %v316 = vmul.f32 %v315, 1.442695
    %v317 = vpow.pop %v316
    %v318 = vadd.f32 %v317, 1.0
    %v319 = vrcp.pop %v318
    %v320 = vmul.f32 1.0, %v319
    %v321 = vsel %vm218, %v314, %v320
    %322 = vrot.lane.b32.xlu0 %v321, 64
    %v323 = vpop.permute.xlu0 %322
    %v324 = vmul.f32 %v321, %v323
    %325 = vrot.lane.b32.xlu0 %v324, 32
    %v326 = vpop.permute.xlu0 %325
    %v327 = vmul.f32 %v321, 0.0
    %v328 = vadd.f32 %v327, %v326
    %v329 = vtanh.pop %v328
    %v330 = vmul.f32 %v323, %v329
    %v331 = vld [vmem:[#allocation5] sm:$0xff]
    %v332 = vld [vmem:[#allocation5 + $0x8] sm:$0xff]
    %v333 = vld [vmem:[#allocation5 + $0x10] sm:$0xff]
    %v334 = vld [vmem:[#allocation5 + $0x18] sm:$0xff]
    %v335 = vld [vmem:[#allocation5 + $0x20] sm:$0xff]
    %v336 = vld [vmem:[#allocation5 + $0x28] sm:$0xff]
    %v337 = vld [vmem:[#allocation5 + $0x30] sm:$0xff]
    %v338 = vld [vmem:[#allocation5 + $0x38] sm:$0xff]
    %v339 = vld [vmem:[#allocation5 + $0x40] sm:$0xff]
    %v340 = vld [vmem:[#allocation5 + $0x48] sm:$0xff]
    %v341 = vld [vmem:[#allocation5 + $0x50] sm:$0xff]
    %v342 = vld [vmem:[#allocation5 + $0x58] sm:$0xff]
    %v343 = vld [vmem:[#allocation5 + $0x60] sm:$0xff]
    %v344 = vld [vmem:[#allocation5 + $0x68] sm:$0xff]
    %v345 = vld [vmem:[#allocation5 + $0x70] sm:$0xff]
    %v346 = vld [vmem:[#allocation5 + $0x78] sm:$0xff]
    %v347 = vld [vmem:[#allocation5 + $0x80] sm:$0xff]
    %v348 = vld [vmem:[#allocation5 + $0x88] sm:$0xff]
    %v349 = vld [vmem:[#allocation5 + $0x90] sm:$0xff]
    %v350 = vld [vmem:[#allocation5 + $0x98] sm:$0xff]
    %v351 = vld [vmem:[#allocation5 + $0xa0] sm:$0xff]
    %v352 = vld [vmem:[#allocation5 + $0xa8] sm:$0xff]
    %v353 = vld [vmem:[#allocation5 + $0xb0] sm:$0xff]
    %v354 = vld [vmem:[#allocation5 + $0xb8] sm:$0xff]
    %v355 = vld [vmem:[#allocation5 + $0xc0] sm:$0xff]
    %v356 = vld [vmem:[#allocation5 + $0xc8] sm:$0xff]
    %v357 = vld [vmem:[#allocation5 + $0xd0] sm:$0xff]
    %v358 = vld [vmem:[#allocation5 + $0xd8] sm:$0xff]
    %v359 = vld [vmem:[#allocation5 + $0xe0] sm:$0xff]
    %v360 = vld [vmem:[#allocation5 + $0xe8] sm:$0xff]
    %v361 = vld [vmem:[#allocation5 + $0xf0] sm:$0xff]
    %v362 = vld [vmem:[#allocation5 + $0xf8] sm:$0xff]
    %363 = vmatprep.subr.mxu0 0.0
    %364 = vmatpush1.msra.mxu0 %v331
    %365 = vmatprep.subr.mxu0 0.0
    %366 = vmatpush1.msra.mxu0 %v332
    %367 = vmatprep.subr.mxu0 0.0
    %368 = vmatpush1.msra.mxu0 %v333
    %369 = vmatprep.subr.mxu0 0.0
    %370 = vmatpush1.msra.mxu0 %v334
    %371 = vmatprep.subr.mxu0 0.0
    %372 = vmatpush1.msra.mxu0 %v335
    %373 = vmatprep.subr.mxu0 0.0
    %374 = vmatpush1.msra.mxu0 %v336
    %375 = vmatprep.subr.mxu0 0.0
    %376 = vmatpush1.msra.mxu0 %v337
    %377 = vmatprep.subr.mxu0 0.0
    %378 = vmatpush1.msra.mxu0 %v338
    %379 = vmatprep.subr.mxu0 0.0
    %380 = vmatpush1.msra.mxu0 %v339
    %381 = vmatprep.subr.mxu0 0.0
    %382 = vmatpush1.msra.mxu0 %v340
    %383 = vmatprep.subr.mxu0 0.0
    %384 = vmatpush1.msra.mxu0 %v341
    %385 = vmatprep.subr.mxu0 0.0
    %386 = vmatpush1.msra.mxu0 %v342
    %387 = vmatprep.subr.mxu0 0.0
    %388 = vmatpush1.msra.mxu0 %v343
    %389 = vmatprep.subr.mxu0 0.0
    %390 = vmatpush1.msra.mxu0 %v344
    %391 = vmatprep.subr.mxu0 0.0
    %392 = vmatpush1.msra.mxu0 %v345
    %393 = vmatprep.subr.mxu0 0.0
    %394 = vmatpush1.msra.mxu0 %v346
    %395 = vmatprep.subr.mxu0 0.0
    %396 = vmatpush1.msra.mxu0 %v347
    %397 = vmatprep.subr.mxu0 0.0
    %398 = vmatpush1.msra.mxu0 %v348
    %399 = vmatprep.subr.mxu0 0.0
    %400 = vmatpush1.msra.mxu0 %v349
    %401 = vmatprep.subr.mxu0 0.0
    %402 = vmatpush1.msra.mxu0 %v350
    %403 = vmatprep.subr.mxu0 0.0
    %404 = vmatpush1.msra.mxu0 %v351
    %405 = vmatprep.subr.mxu0 0.0
    %406 = vmatpush1.msra.mxu0 %v352
    %407 = vmatprep.subr.mxu0 0.0
    %408 = vmatpush1.msra.mxu0 %v353
    %409 = vmatprep.subr.mxu0 0.0
    %410 = vmatpush1.msra.mxu0 %v354
    %411 = vmatprep.subr.mxu0 0.0
    %412 = vmatpush1.msra.mxu0 %v355
    %413 = vmatprep.subr.mxu0 0.0
    %414 = vmatpush1.msra.mxu0 %v356
    %415 = vmatprep.subr.mxu0 0.0
    %416 = vmatpush1.msra.mxu0 %v357
    %417 = vmatprep.subr.mxu0 0.0
    %418 = vmatpush1.msra.mxu0 %v358
    %419 = vmatprep.subr.mxu0 0.0
    %420 = vmatpush1.msra.mxu0 %v359
    %421 = vmatprep.subr.mxu0 0.0
    %422 = vmatpush1.msra.mxu0 %v360
    %423 = vmatprep.subr.mxu0 0.0
    %424 = vmatpush1.msra.mxu0 %v361
    %425 = vmatprep.subr.mxu0 0.0
    %426 = vmatpush1.msra.mxu0 %v362
    %427 = vmatprep.mubr.f32.mxu0 0.0
    %428 = vmatmul.mubr.f32.gmra.mrb[0].mxu0 %v330
    %v429 = vpop.f32.mrb[0].mxu0
    %v430 = vadd.f32 %v224, %v429
    %v431 = vpop.f32.mrb[0].mxu0
    %432 = vdwg.mxu0
    %v433 = vtanh.pop %v430
    %v434 = vxor.u32 %v430, 2147483648
    %v435 = vmul.f32 %v434, 1.442695
    %v436 = vpow.pop %v435
    %v437 = vadd.f32 %v436, 1.0
    %v438 = vrcp.pop %v437
    %v439 = vmul.f32 1.0, %v438
    %v440 = vsel %vm218, %v433, %v439
    %441 = vrot.lane.b32.xlu0 %v440, 64
    %v442 = vpop.permute.xlu0 %441
    %v443 = vmul.f32 %v440, %v442
    %444 = vrot.lane.b32.xlu0 %v443, 32
    %v445 = vpop.permute.xlu0 %444
    %v446 = vmul.f32 %v440, 0.0
    %v447 = vadd.f32 %v446, %v445
    %v448 = vtanh.pop %v447
    %v449 = vmul.f32 %v442, %v448
    %v450 = vld [vmem:[#allocation2 + $0x8] sm:$0xff]
    %451 = vmatprep.subr.mxu0 0.0
    %452 = vmatpush1.msra.mxu0 %v227
    %453 = vmatprep.subr.mxu0 0.0
    %454 = vmatpush1.msra.mxu0 %v228
    %455 = vmatprep.subr.mxu0 0.0
    %456 = vmatpush1.msra.mxu0 %v229
    %457 = vmatprep.subr.mxu0 0.0
    %458 = vmatpush1.msra.mxu0 %v230
    %459 = vmatprep.subr.mxu0 0.0
    %460 = vmatpush1.msra.mxu0 %v231
    %461 = vmatprep.subr.mxu0 0.0
    %462 = vmatpush1.msra.mxu0 %v232
    %463 = vmatprep.subr.mxu0 0.0
    %464 = vmatpush1.msra.mxu0 %v233
    %465 = vmatprep.subr.mxu0 0.0
    %466 = vmatpush1.msra.mxu0 %v234
    %467 = vmatprep.subr.mxu0 0.0
    %468 = vmatpush1.msra.mxu0 %v235
    %469 = vmatprep.subr.mxu0 0.0
    %470 = vmatpush1.msra.mxu0 %v236
    %471 = vmatprep.subr.mxu0 0.0
    %472 = vmatpush1.msra.mxu0 %v237
    %473 = vmatprep.subr.mxu0 0.0
    %474 = vmatpush1.msra.mxu0 %v238
    %475 = vmatprep.subr.mxu0 0.0
    %476 = vmatpush1.msra.mxu0 %v239
    %477 = vmatprep.subr.mxu0 0.0
    %478 = vmatpush1.msra.mxu0 %v240
    %479 = vmatprep.subr.mxu0 0.0
    %480 = vmatpush1.msra.mxu0 %v241
    %481 = vmatprep.subr.mxu0 0.0
    %482 = vmatpush1.msra.mxu0 %v242
    %483 = vmatprep.subr.mxu0 0.0
    %484 = vmatpush1.msra.mxu0 0.0
    %485 = vmatprep.subr.mxu0 0.0
    %486 = vmatpush1.msra.mxu0 0.0
    %487 = vmatprep.subr.mxu0 0.0
    %488 = vmatpush1.msra.mxu0 0.0
    %489 = vmatprep.subr.mxu0 0.0
    %490 = vmatpush1.msra.mxu0 0.0
    %491 = vmatprep.subr.mxu0 0.0
    %492 = vmatpush1.msra.mxu0 0.0
    %493 = vmatprep.subr.mxu0 0.0
    %494 = vmatpush1.msra.mxu0 0.0
    %495 = vmatprep.subr.mxu0 0.0
    %496 = vmatpush1.msra.mxu0 0.0
    %497 = vmatprep.subr.mxu0 0.0
    %498 = vmatpush1.msra.mxu0 0.0
    %499 = vmatprep.subr.mxu0 0.0
    %500 = vmatpush1.msra.mxu0 0.0
    %501 = vmatprep.subr.mxu0 0.0
    %502 = vmatpush1.msra.mxu0 0.0
    %503 = vmatprep.subr.mxu0 0.0
    %504 = vmatpush1.msra.mxu0 0.0
    %505 = vmatprep.subr.mxu0 0.0
    %506 = vmatpush1.msra.mxu0 0.0
    %507 = vmatprep.subr.mxu0 0.0
    %508 = vmatpush1.msra.mxu0 0.0
    %509 = vmatprep.subr.mxu0 0.0
    %510 = vmatpush1.msra.mxu0 0.0
    %511 = vmatprep.subr.mxu0 0.0
    %512 = vmatpush1.msra.mxu0 0.0
    %513 = vmatprep.subr.mxu0 0.0
    %514 = vmatpush1.msra.mxu0 0.0
    %515 = vmatprep.mubr.f32.mxu0 0.0
    %516 = vmatmul.mubr.f32.gmra.mrb[0].mxu0 %v330
    %v517 = vpop.f32.mrb[0].mxu0
    %v518 = vadd.f32 0.0, %v517
    %v519 = vpop.f32.mrb[0].mxu0
    %520 = vdwg.mxu0
    %v521 = vadd.f32 %v450, %v518
    %v522 = vtanh.pop %v521
    %v523 = vxor.u32 %v521, 2147483648
    %v524 = vmul.f32 %v523, 1.442695
    %v525 = vpow.pop %v524
    %v526 = vadd.f32 %v525, 1.0
    %v527 = vrcp.pop %v526
    %v528 = vmul.f32 1.0, %v527
    %v529 = vsel %vm218, %v522, %v528
    %530 = vrot.lane.b32.xlu0 %v529, 64
    %v531 = vpop.permute.xlu0 %530
    %v532 = vmul.f32 %v529, %v531
    %533 = vrot.lane.b32.xlu0 %v532, 32
    %v534 = vpop.permute.xlu0 %533
    %v535 = vmul.f32 %v529, %v328
    %v536 = vadd.f32 %v535, %v534
    %v537 = vtanh.pop %v536
    %v538 = vmul.f32 %v531, %v537
    %539 = vmatprep.subr.mxu0 0.0
    %540 = vmatpush1.msra.mxu0 %v331
    %541 = vmatprep.subr.mxu0 0.0
    %542 = vmatpush1.msra.mxu0 %v332
    %543 = vmatprep.subr.mxu0 0.0
    %544 = vmatpush1.msra.mxu0 %v333
    %545 = vmatprep.subr.mxu0 0.0
    %546 = vmatpush1.msra.mxu0 %v334
    %547 = vmatprep.subr.mxu0 0.0
    %548 = vmatpush1.msra.mxu0 %v335
    %549 = vmatprep.subr.mxu0 0.0
    %550 = vmatpush1.msra.mxu0 %v336
    %551 = vmatprep.subr.mxu0 0.0
    %552 = vmatpush1.msra.mxu0 %v337
    %553 = vmatprep.subr.mxu0 0.0
    %554 = vmatpush1.msra.mxu0 %v338
    %555 = vmatprep.subr.mxu0 0.0
    %556 = vmatpush1.msra.mxu0 %v339
    %557 = vmatprep.subr.mxu0 0.0
    %558 = vmatpush1.msra.mxu0 %v340
    %559 = vmatprep.subr.mxu0 0.0
    %560 = vmatpush1.msra.mxu0 %v341
    %561 = vmatprep.subr.mxu0 0.0
    %562 = vmatpush1.msra.mxu0 %v342
    %563 = vmatprep.subr.mxu0 0.0
    %564 = vmatpush1.msra.mxu0 %v343
    %565 = vmatprep.subr.mxu0 0.0
    %566 = vmatpush1.msra.mxu0 %v344
    %567 = vmatprep.subr.mxu0 0.0
    %568 = vmatpush1.msra.mxu0 %v345
    %569 = vmatprep.subr.mxu0 0.0
    %570 = vmatpush1.msra.mxu0 %v346
    %571 = vmatprep.subr.mxu0 0.0
    %572 = vmatpush1.msra.mxu0 %v347
    %573 = vmatprep.subr.mxu0 0.0
    %574 = vmatpush1.msra.mxu0 %v348
    %575 = vmatprep.subr.mxu0 0.0
    %576 = vmatpush1.msra.mxu0 %v349
    %577 = vmatprep.subr.mxu0 0.0
    %578 = vmatpush1.msra.mxu0 %v350
    %579 = vmatprep.subr.mxu0 0.0
    %580 = vmatpush1.msra.mxu0 %v351
    %581 = vmatprep.subr.mxu0 0.0
    %582 = vmatpush1.msra.mxu0 %v352
    %583 = vmatprep.subr.mxu0 0.0
    %584 = vmatpush1.msra.mxu0 %v353
    %585 = vmatprep.subr.mxu0 0.0
    %586 = vmatpush1.msra.mxu0 %v354
    %587 = vmatprep.subr.mxu0 0.0
    %588 = vmatpush1.msra.mxu0 %v355
    %589 = vmatprep.subr.mxu0 0.0
    %590 = vmatpush1.msra.mxu0 %v356
    %591 = vmatprep.subr.mxu0 0.0
    %592 = vmatpush1.msra.mxu0 %v357
    %593 = vmatprep.subr.mxu0 0.0
    %594 = vmatpush1.msra.mxu0 %v358
    %595 = vmatprep.subr.mxu0 0.0
    %596 = vmatpush1.msra.mxu0 %v359
    %597 = vmatprep.subr.mxu0 0.0
    %598 = vmatpush1.msra.mxu0 %v360
    %599 = vmatprep.subr.mxu0 0.0
    %600 = vmatpush1.msra.mxu0 %v361
    %601 = vmatprep.subr.mxu0 0.0
    %602 = vmatpush1.msra.mxu0 %v362
    %603 = vmatprep.mubr.f32.mxu0 %v449
    %604 = vmatmul.mubr.f32.gmra.mrb[0].mxu0 %v538
    %v605 = vpop.f32.mrb[0].mxu0
    %v606 = vadd.f32 %v224, %v605
    %v607 = vpop.f32.mrb[0].mxu0
    %608 = vdwg.mxu0
    %v609 = vtanh.pop %v606
    %v610 = vxor.u32 %v606, 2147483648
    %v611 = vmul.f32 %v610, 1.442695
    %v612 = vpow.pop %v611
    %v613 = vadd.f32 %v612, 1.0
    %v614 = vrcp.pop %v613
    %v615 = vmul.f32 1.0, %v614
    %v616 = vsel %vm218, %v609, %v615
    %617 = vrot.lane.b32.xlu0 %v616, 64
    %v618 = vpop.permute.xlu0 %617
    %v619 = vmul.f32 %v616, %v618
    %620 = vrot.lane.b32.xlu0 %v619, 32
    %v621 = vpop.permute.xlu0 %620
    %v622 = vmul.f32 %v616, %v447
    %v623 = vadd.f32 %v622, %v621
    %v624 = vtanh.pop %v623
    %v625 = vmul.f32 %v618, %v624
    %v626 = vld [vmem:[#allocation2 + $0x10] sm:$0xff]
    %627 = vmatprep.subr.mxu0 0.0
    %628 = vmatpush1.msra.mxu0 %v227
    %629 = vmatprep.subr.mxu0 0.0
    %630 = vmatpush1.msra.mxu0 %v228
    %631 = vmatprep.subr.mxu0 0.0
    %632 = vmatpush1.msra.mxu0 %v229
    %633 = vmatprep.subr.mxu0 0.0
    %634 = vmatpush1.msra.mxu0 %v230
    %635 = vmatprep.subr.mxu0 0.0
    %636 = vmatpush1.msra.mxu0 %v231
    %637 = vmatprep.subr.mxu0 0.0
    %638 = vmatpush1.msra.mxu0 %v232
    %639 = vmatprep.subr.mxu0 0.0
    %640 = vmatpush1.msra.mxu0 %v233
    %641 = vmatprep.subr.mxu0 0.0
    %642 = vmatpush1.msra.mxu0 %v234
    %643 = vmatprep.subr.mxu0 0.0
    %644 = vmatpush1.msra.mxu0 %v235
    %645 = vmatprep.subr.mxu0 0.0
    %646 = vmatpush1.msra.mxu0 %v236
    %647 = vmatprep.subr.mxu0 0.0
    %648 = vmatpush1.msra.mxu0 %v237
    %649 = vmatprep.subr.mxu0 0.0
    %650 = vmatpush1.msra.mxu0 %v238
    %651 = vmatprep.subr.mxu0 0.0
    %652 = vmatpush1.msra.mxu0 %v239
    %653 = vmatprep.subr.mxu0 0.0
    %654 = vmatpush1.msra.mxu0 %v240
    %655 = vmatprep.subr.mxu0 0.0
    %656 = vmatpush1.msra.mxu0 %v241
    %657 = vmatprep.subr.mxu0 0.0
    %658 = vmatpush1.msra.mxu0 %v242
    %659 = vmatprep.subr.mxu0 0.0
    %660 = vmatpush1.msra.mxu0 0.0
    %661 = vmatprep.subr.mxu0 0.0
    %662 = vmatpush1.msra.mxu0 0.0
    %663 = vmatprep.subr.mxu0 0.0
    %664 = vmatpush1.msra.mxu0 0.0
    %665 = vmatprep.subr.mxu0 0.0
    %666 = vmatpush1.msra.mxu0 0.0
    %667 = vmatprep.subr.mxu0 0.0
    %668 = vmatpush1.msra.mxu0 0.0
    %669 = vmatprep.subr.mxu0 0.0
    %670 = vmatpush1.msra.mxu0 0.0
    %671 = vmatprep.subr.mxu0 0.0
    %672 = vmatpush1.msra.mxu0 0.0
    %673 = vmatprep.subr.mxu0 0.0
    %674 = vmatpush1.msra.mxu0 0.0
    %675 = vmatprep.subr.mxu0 0.0
    %676 = vmatpush1.msra.mxu0 0.0
    %677 = vmatprep.subr.mxu0 0.0
    %678 = vmatpush1.msra.mxu0 0.0
    %679 = vmatprep.subr.mxu0 0.0
    %680 = vmatpush1.msra.mxu0 0.0
    %681 = vmatprep.subr.mxu0 0.0
    %682 = vmatpush1.msra.mxu0 0.0
    %683 = vmatprep.subr.mxu0 0.0
    %684 = vmatpush1.msra.mxu0 0.0
    %685 = vmatprep.subr.mxu0 0.0
    %686 = vmatpush1.msra.mxu0 0.0
    %687 = vmatprep.subr.mxu0 0.0
    %688 = vmatpush1.msra.mxu0 0.0
    %689 = vmatprep.subr.mxu0 0.0
    %690 = vmatpush1.msra.mxu0 0.0
    %691 = vmatprep.mubr.f32.mxu0 0.0
    %692 = vmatmul.mubr.f32.gmra.mrb[0].mxu0 %v538
    %v693 = vpop.f32.mrb[0].mxu0
    %v694 = vadd.f32 0.0, %v693
    %v695 = vpop.f32.mrb[0].mxu0
    %696 = vdwg.mxu0
    %v697 = vadd.f32 %v626, %v694
    %v698 = vtanh.pop %v697
    %v699 = vxor.u32 %v697, 2147483648
    %v700 = vmul.f32 %v699, 1.442695
    %v701 = vpow.pop %v700
    %v702 = vadd.f32 %v701, 1.0
    %v703 = vrcp.pop %v702
    %v704 = vmul.f32 1.0, %v703
    %v705 = vsel %vm218, %v698, %v704
    %706 = vrot.lane.b32.xlu0 %v705, 64
    %v707 = vpop.permute.xlu0 %706
    %v708 = vmul.f32 %v705, %v707
    %709 = vrot.lane.b32.xlu0 %v708, 32
    %v710 = vpop.permute.xlu0 %709
    %v711 = vmul.f32 %v705, %v536
    %v712 = vadd.f32 %v711, %v710
    %v713 = vtanh.pop %v712
    %v714 = vmul.f32 %v707, %v713
    %715 = vmatprep.subr.mxu0 0.0
    %716 = vmatpush1.msra.mxu0 %v331
    %717 = vmatprep.subr.mxu0 0.0
    %718 = vmatpush1.msra.mxu0 %v332
    %719 = vmatprep.subr.mxu0 0.0
    %720 = vmatpush1.msra.mxu0 %v333
    %721 = vmatprep.subr.mxu0 0.0
    %722 = vmatpush1.msra.mxu0 %v334
    %723 = vmatprep.subr.mxu0 0.0
    %724 = vmatpush1.msra.mxu0 %v335
    %725 = vmatprep.subr.mxu0 0.0
    %726 = vmatpush1.msra.mxu0 %v336
    %727 = vmatprep.subr.mxu0 0.0
    %728 = vmatpush1.msra.mxu0 %v337
    %729 = vmatprep.subr.mxu0 0.0
    %730 = vmatpush1.msra.mxu0 %v338
    %731 = vmatprep.subr.mxu0 0.0
    %732 = vmatpush1.msra.mxu0 %v339
    %733 = vmatprep.subr.mxu0 0.0
    %734 = vmatpush1.msra.mxu0 %v340
    %735 = vmatprep.subr.mxu0 0.0
    %736 = vmatpush1.msra.mxu0 %v341
    %737 = vmatprep.subr.mxu0 0.0
    %738 = vmatpush1.msra.mxu0 %v342
    %739 = vmatprep.subr.mxu0 0.0
    %740 = vmatpush1.msra.mxu0 %v343
    %741 = vmatprep.subr.mxu0 0.0
    %742 = vmatpush1.msra.mxu0 %v344
    %743 = vmatprep.subr.mxu0 0.0
    %744 = vmatpush1.msra.mxu0 %v345
    %745 = vmatprep.subr.mxu0 0.0
    %746 = vmatpush1.msra.mxu0 %v346
    %747 = vmatprep.subr.mxu0 0.0
    %748 = vmatpush1.msra.mxu0 %v347
    %749 = vmatprep.subr.mxu0 0.0
    %750 = vmatpush1.msra.mxu0 %v348
    %751 = vmatprep.subr.mxu0 0.0
    %752 = vmatpush1.msra.mxu0 %v349
    %753 = vmatprep.subr.mxu0 0.0
    %754 = vmatpush1.msra.mxu0 %v350
    %755 = vmatprep.subr.mxu0 0.0
    %756 = vmatpush1.msra.mxu0 %v351
    %757 = vmatprep.subr.mxu0 0.0
    %758 = vmatpush1.msra.mxu0 %v352
    %759 = vmatprep.subr.mxu0 0.0
    %760 = vmatpush1.msra.mxu0 %v353
    %761 = vmatprep.subr.mxu0 0.0
    %762 = vmatpush1.msra.mxu0 %v354
    %763 = vmatprep.subr.mxu0 0.0
    %764 = vmatpush1.msra.mxu0 %v355
    %765 = vmatprep.subr.mxu0 0.0
    %766 = vmatpush1.msra.mxu0 %v356
    %767 = vmatprep.subr.mxu0 0.0
    %768 = vmatpush1.msra.mxu0 %v357
    %769 = vmatprep.subr.mxu0 0.0
    %770 = vmatpush1.msra.mxu0 %v358
    %771 = vmatprep.subr.mxu0 0.0
    %772 = vmatpush1.msra.mxu0 %v359
    %773 = vmatprep.subr.mxu0 0.0
    %774 = vmatpush1.msra.mxu0 %v360
    %775 = vmatprep.subr.mxu0 0.0
    %776 = vmatpush1.msra.mxu0 %v361
    %777 = vmatprep.subr.mxu0 0.0
    %778 = vmatpush1.msra.mxu0 %v362
    %779 = vmatprep.mubr.f32.mxu0 %v625
    %780 = vmatmul.mubr.f32.gmra.mrb[0].mxu0 %v714
    %v781 = vpop.f32.mrb[0].mxu0
    %v782 = vadd.f32 %v224, %v781
    %v783 = vpop.f32.mrb[0].mxu0
    %784 = vdwg.mxu0
    %v785 = vtanh.pop %v782
    %v786 = vxor.u32 %v782, 2147483648
    %v787 = vmul.f32 %v786, 1.442695
    %v788 = vpow.pop %v787
    %v789 = vadd.f32 %v788, 1.0
    %v790 = vrcp.pop %v789
    %v791 = vmul.f32 1.0, %v790
    %v792 = vsel %vm218, %v785, %v791
    %793 = vrot.lane.b32.xlu0 %v792, 64
    %v794 = vpop.permute.xlu0 %793
    %v795 = vmul.f32 %v792, %v794
    %796 = vrot.lane.b32.xlu0 %v795, 32
    %v797 = vpop.permute.xlu0 %796
    %v798 = vmul.f32 %v792, %v623
    %v799 = vadd.f32 %v798, %v797
    %v800 = vtanh.pop %v799
    %v801 = vmul.f32 %v794, %v800
    %v802 = vld [vmem:[#allocation2 + $0x18] sm:$0xff]
    %803 = vmatprep.subr.mxu0 0.0
    %804 = vmatpush1.msra.mxu0 %v227
    %805 = vmatprep.subr.mxu0 0.0
    %806 = vmatpush1.msra.mxu0 %v228
    %807 = vmatprep.subr.mxu0 0.0
    %808 = vmatpush1.msra.mxu0 %v229
    %809 = vmatprep.subr.mxu0 0.0
    %810 = vmatpush1.msra.mxu0 %v230
    %811 = vmatprep.subr.mxu0 0.0
    %812 = vmatpush1.msra.mxu0 %v231
    %813 = vmatprep.subr.mxu0 0.0
    %814 = vmatpush1.msra.mxu0 %v232
    %815 = vmatprep.subr.mxu0 0.0
    %816 = vmatpush1.msra.mxu0 %v233
    %817 = vmatprep.subr.mxu0 0.0
    %818 = vmatpush1.msra.mxu0 %v234
    %819 = vmatprep.subr.mxu0 0.0
    %820 = vmatpush1.msra.mxu0 %v235
    %821 = vmatprep.subr.mxu0 0.0
    %822 = vmatpush1.msra.mxu0 %v236
    %823 = vmatprep.subr.mxu0 0.0
    %824 = vmatpush1.msra.mxu0 %v237
    %825 = vmatprep.subr.mxu0 0.0
    %826 = vmatpush1.msra.mxu0 %v238
    %827 = vmatprep.subr.mxu0 0.0
    %828 = vmatpush1.msra.mxu0 %v239
    %829 = vmatprep.subr.mxu0 0.0
    %830 = vmatpush1.msra.mxu0 %v240
    %831 = vmatprep.subr.mxu0 0.0
    %832 = vmatpush1.msra.mxu0 %v241
    %833 = vmatprep.subr.mxu0 0.0
    %834 = vmatpush1.msra.mxu0 %v242
    %835 = vmatprep.subr.mxu0 0.0
    %836 = vmatpush1.msra.mxu0 0.0
    %837 = vmatprep.subr.mxu0 0.0
    %838 = vmatpush1.msra.mxu0 0.0
    %839 = vmatprep.subr.mxu0 0.0
    %840 = vmatpush1.msra.mxu0 0.0
    %841 = vmatprep.subr.mxu0 0.0
    %842 = vmatpush1.msra.mxu0 0.0
    %843 = vmatprep.subr.mxu0 0.0
    %844 = vmatpush1.msra.mxu0 0.0
    %845 = vmatprep.subr.mxu0 0.0
    %846 = vmatpush1.msra.mxu0 0.0
    %847 = vmatprep.subr.mxu0 0.0
    %848 = vmatpush1.msra.mxu0 0.0
    %849 = vmatprep.subr.mxu0 0.0
    %850 = vmatpush1.msra.mxu0 0.0
    %851 = vmatprep.subr.mxu0 0.0
    %852 = vmatpush1.msra.mxu0 0.0
    %853 = vmatprep.subr.mxu0 0.0
    %854 = vmatpush1.msra.mxu0 0.0
    %855 = vmatprep.subr.mxu0 0.0
    %856 = vmatpush1.msra.mxu0 0.0
    %857 = vmatprep.subr.mxu0 0.0
    %858 = vmatpush1.msra.mxu0 0.0
    %859 = vmatprep.subr.mxu0 0.0
    %860 = vmatpush1.msra.mxu0 0.0
    %861 = vmatprep.subr.mxu0 0.0
    %862 = vmatpush1.msra.mxu0 0.0
    %863 = vmatprep.subr.mxu0 0.0
    %864 = vmatpush1.msra.mxu0 0.0
    %865 = vmatprep.subr.mxu0 0.0
    %866 = vmatpush1.msra.mxu0 0.0
    %867 = vmatprep.mubr.f32.mxu0 0.0
    %868 = vmatmul.mubr.f32.gmra.mrb[0].mxu0 %v714
    %v869 = vpop.f32.mrb[0].mxu0
    %v870 = vadd.f32 0.0, %v869
    %v871 = vpop.f32.mrb[0].mxu0
    %872 = vdwg.mxu0
    %v873 = vadd.f32 %v802, %v870
    %v874 = vtanh.pop %v873
    %v875 = vxor.u32 %v873, 2147483648
    %v876 = vmul.f32 %v875, 1.442695
    %v877 = vpow.pop %v876
    %v878 = vadd.f32 %v877, 1.0
    %v879 = vrcp.pop %v878
    %v880 = vmul.f32 1.0, %v879
    %v881 = vsel %vm218, %v874, %v880
    %882 = vrot.lane.b32.xlu0 %v881, 64
    %v883 = vpop.permute.xlu0 %882
    %v884 = vmul.f32 %v881, %v883
    %885 = vrot.lane.b32.xlu0 %v884, 32
    %v886 = vpop.permute.xlu0 %885
    %v887 = vmul.f32 %v881, %v712
    %v888 = vadd.f32 %v887, %v886
    %v889 = vtanh.pop %v888
    %v890 = vmul.f32 %v883, %v889
    %891 = vmatprep.subr.mxu0 0.0
    %892 = vmatpush1.msra.mxu0 %v331
    %893 = vmatprep.subr.mxu0 0.0
    %894 = vmatpush1.msra.mxu0 %v332
    %895 = vmatprep.subr.mxu0 0.0
    %896 = vmatpush1.msra.mxu0 %v333
    %897 = vmatprep.subr.mxu0 0.0
    %898 = vmatpush1.msra.mxu0 %v334
    %899 = vmatprep.subr.mxu0 0.0
    %900 = vmatpush1.msra.mxu0 %v335
    %901 = vmatprep.subr.mxu0 0.0
    %902 = vmatpush1.msra.mxu0 %v336
    %903 = vmatprep.subr.mxu0 0.0
    %904 = vmatpush1.msra.mxu0 %v337
    %905 = vmatprep.subr.mxu0 0.0
    %906 = vmatpush1.msra.mxu0 %v338
    %907 = vmatprep.subr.mxu0 0.0
    %908 = vmatpush1.msra.mxu0 %v339
    %909 = vmatprep.subr.mxu0 0.0
    %910 = vmatpush1.msra.mxu0 %v340
    %911 = vmatprep.subr.mxu0 0.0
    %912 = vmatpush1.msra.mxu0 %v341
    %913 = vmatprep.subr.mxu0 0.0
    %914 = vmatpush1.msra.mxu0 %v342
    %915 = vmatprep.subr.mxu0 0.0
    %916 = vmatpush1.msra.mxu0 %v343
    %917 = vmatprep.subr.mxu0 0.0
    %918 = vmatpush1.msra.mxu0 %v344
    %919 = vmatprep.subr.mxu0 0.0
    %920 = vmatpush1.msra.mxu0 %v345
    %921 = vmatprep.subr.mxu0 0.0
    %922 = vmatpush1.msra.mxu0 %v346
    %923 = vmatprep.subr.mxu0 0.0
    %924 = vmatpush1.msra.mxu0 %v347
    %925 = vmatprep.subr.mxu0 0.0
    %926 = vmatpush1.msra.mxu0 %v348
    %927 = vmatprep.subr.mxu0 0.0
    %928 = vmatpush1.msra.mxu0 %v349
    %929 = vmatprep.subr.mxu0 0.0
    %930 = vmatpush1.msra.mxu0 %v350
    %931 = vmatprep.subr.mxu0 0.0
    %932 = vmatpush1.msra.mxu0 %v351
    %933 = vmatprep.subr.mxu0 0.0
    %934 = vmatpush1.msra.mxu0 %v352
    %935 = vmatprep.subr.mxu0 0.0
    %936 = vmatpush1.msra.mxu0 %v353
    %937 = vmatprep.subr.mxu0 0.0
    %938 = vmatpush1.msra.mxu0 %v354
    %939 = vmatprep.subr.mxu0 0.0
    %940 = vmatpush1.msra.mxu0 %v355
    %941 = vmatprep.subr.mxu0 0.0
    %942 = vmatpush1.msra.mxu0 %v356
    %943 = vmatprep.subr.mxu0 0.0
    %944 = vmatpush1.msra.mxu0 %v357
    %945 = vmatprep.subr.mxu0 0.0
    %946 = vmatpush1.msra.mxu0 %v358
    %947 = vmatprep.subr.mxu0 0.0
    %948 = vmatpush1.msra.mxu0 %v359
    %949 = vmatprep.subr.mxu0 0.0
    %950 = vmatpush1.msra.mxu0 %v360
    %951 = vmatprep.subr.mxu0 0.0
    %952 = vmatpush1.msra.mxu0 %v361
    %953 = vmatprep.subr.mxu0 0.0
    %954 = vmatpush1.msra.mxu0 %v362
    %955 = vmatprep.mubr.f32.mxu0 %v801
    %956 = vmatmul.mubr.f32.gmra.mrb[0].mxu0 %v890
    %v957 = vpop.f32.mrb[0].mxu0
    %v958 = vadd.f32 %v224, %v957
    %v959 = vpop.f32.mrb[0].mxu0
    %960 = vdwg.mxu0
    %v961 = vtanh.pop %v958
    %v962 = vxor.u32 %v958, 2147483648
    %v963 = vmul.f32 %v962, 1.442695
    %v964 = vpow.pop %v963
    %v965 = vadd.f32 %v964, 1.0
    %v966 = vrcp.pop %v965
    %v967 = vmul.f32 1.0, %v966
    %v968 = vsel %vm218, %v961, %v967
    %969 = vrot.lane.b32.xlu0 %v968, 64
    %v970 = vpop.permute.xlu0 %969
    %v971 = vmul.f32 %v968, %v970
    %972 = vrot.lane.b32.xlu0 %v971, 32
    %v973 = vpop.permute.xlu0 %972
    %v974 = vmul.f32 %v968, %v799
    %v975 = vadd.f32 %v974, %v973
    %v976 = vtanh.pop %v975
    %v977 = vmul.f32 %v970, %v976
    %v978 = vld [vmem:[#allocation2 + $0x20] sm:$0xff]
    %979 = vmatprep.subr.mxu0 0.0
    %980 = vmatpush1.msra.mxu0 %v227
    %981 = vmatprep.subr.mxu0 0.0
    %982 = vmatpush1.msra.mxu0 %v228
    %983 = vmatprep.subr.mxu0 0.0
    %984 = vmatpush1.msra.mxu0 %v229
    %985 = vmatprep.subr.mxu0 0.0
    %986 = vmatpush1.msra.mxu0 %v230
    %987 = vmatprep.subr.mxu0 0.0
    %988 = vmatpush1.msra.mxu0 %v231
    %989 = vmatprep.subr.mxu0 0.0
    %990 = vmatpush1.msra.mxu0 %v232
    %991 = vmatprep.subr.mxu0 0.0
    %992 = vmatpush1.msra.mxu0 %v233
    %993 = vmatprep.subr.mxu0 0.0
    %994 = vmatpush1.msra.mxu0 %v234
    %995 = vmatprep.subr.mxu0 0.0
    %996 = vmatpush1.msra.mxu0 %v235
    %997 = vmatprep.subr.mxu0 0.0
    %998 = vmatpush1.msra.mxu0 %v236
    %999 = vmatprep.subr.mxu0 0.0
    %1000 = vmatpush1.msra.mxu0 %v237
    %1001 = vmatprep.subr.mxu0 0.0
    %1002 = vmatpush1.msra.mxu0 %v238
    %1003 = vmatprep.subr.mxu0 0.0
    %1004 = vmatpush1.msra.mxu0 %v239
    %1005 = vmatprep.subr.mxu0 0.0
    %1006 = vmatpush1.msra.mxu0 %v240
    %1007 = vmatprep.subr.mxu0 0.0
    %1008 = vmatpush1.msra.mxu0 %v241
    %1009 = vmatprep.subr.mxu0 0.0
    %1010 = vmatpush1.msra.mxu0 %v242
    %1011 = vmatprep.subr.mxu0 0.0
    %1012 = vmatpush1.msra.mxu0 0.0
    %1013 = vmatprep.subr.mxu0 0.0
    %1014 = vmatpush1.msra.mxu0 0.0
    %1015 = vmatprep.subr.mxu0 0.0
    %1016 = vmatpush1.msra.mxu0 0.0
    %1017 = vmatprep.subr.mxu0 0.0
    %1018 = vmatpush1.msra.mxu0 0.0
    %1019 = vmatprep.subr.mxu0 0.0
    %1020 = vmatpush1.msra.mxu0 0.0
    %1021 = vmatprep.subr.mxu0 0.0
    %1022 = vmatpush1.msra.mxu0 0.0
    %1023 = vmatprep.subr.mxu0 0.0
    %1024 = vmatpush1.msra.mxu0 0.0
    %1025 = vmatprep.subr.mxu0 0.0
    %1026 = vmatpush1.msra.mxu0 0.0
    %1027 = vmatprep.subr.mxu0 0.0
    %1028 = vmatpush1.msra.mxu0 0.0
    %1029 = vmatprep.subr.mxu0 0.0
    %1030 = vmatpush1.msra.mxu0 0.0
    %1031 = vmatprep.subr.mxu0 0.0
    %1032 = vmatpush1.msra.mxu0 0.0
    %1033 = vmatprep.subr.mxu0 0.0
    %1034 = vmatpush1.msra.mxu0 0.0
    %1035 = vmatprep.subr.mxu0 0.0
    %1036 = vmatpush1.msra.mxu0 0.0
    %1037 = vmatprep.subr.mxu0 0.0
    %1038 = vmatpush1.msra.mxu0 0.0
    %1039 = vmatprep.subr.mxu0 0.0
    %1040 = vmatpush1.msra.mxu0 0.0
    %1041 = vmatprep.subr.mxu0 0.0
    %1042 = vmatpush1.msra.mxu0 0.0
    %1043 = vmatprep.mubr.f32.mxu0 0.0
    %1044 = vmatmul.mubr.f32.gmra.mrb[0].mxu0 %v890
    %v1045 = vpop.f32.mrb[0].mxu0
    %v1046 = vadd.f32 0.0, %v1045
    %v1047 = vpop.f32.mrb[0].mxu0
    %1048 = vdwg.mxu0
    %v1049 = vadd.f32 %v978, %v1046
    %v1050 = vtanh.pop %v1049
    %v1051 = vxor.u32 %v1049, 2147483648
    %v1052 = vmul.f32 %v1051, 1.442695
    %v1053 = vpow.pop %v1052
    %v1054 = vadd.f32 %v1053, 1.0
    %v1055 = vrcp.pop %v1054
    %v1056 = vmul.f32 1.0, %v1055
    %v1057 = vsel %vm218, %v1050, %v1056
    %1058 = vrot.lane.b32.xlu0 %v1057, 64
    %v1059 = vpop.permute.xlu0 %1058
    %v1060 = vmul.f32 %v1057, %v1059
    %1061 = vrot.lane.b32.xlu0 %v1060, 32
    %v1062 = vpop.permute.xlu0 %1061
    %v1063 = vmul.f32 %v1057, %v888
    %v1064 = vadd.f32 %v1063, %v1062
    %v1065 = vtanh.pop %v1064
    %v1066 = vmul.f32 %v1059, %v1065
    %1067 = vmatprep.subr.mxu0 0.0
    %1068 = vmatpush1.msra.mxu0 %v331
    %1069 = vmatprep.subr.mxu0 0.0
    %1070 = vmatpush1.msra.mxu0 %v332
    %1071 = vmatprep.subr.mxu0 0.0
    %1072 = vmatpush1.msra.mxu0 %v333
    %1073 = vmatprep.subr.mxu0 0.0
    %1074 = vmatpush1.msra.mxu0 %v334
    %1075 = vmatprep.subr.mxu0 0.0
    %1076 = vmatpush1.msra.mxu0 %v335
    %1077 = vmatprep.subr.mxu0 0.0
    %1078 = vmatpush1.msra.mxu0 %v336
    %1079 = vmatprep.subr.mxu0 0.0
    %1080 = vmatpush1.msra.mxu0 %v337
    %1081 = vmatprep.subr.mxu0 0.0
    %1082 = vmatpush1.msra.mxu0 %v338
    %1083 = vmatprep.subr.mxu0 0.0
    %1084 = vmatpush1.msra.mxu0 %v339
    %1085 = vmatprep.subr.mxu0 0.0
    %1086 = vmatpush1.msra.mxu0 %v340
    %1087 = vmatprep.subr.mxu0 0.0
    %1088 = vmatpush1.msra.mxu0 %v341
    %1089 = vmatprep.subr.mxu0 0.0
    %1090 = vmatpush1.msra.mxu0 %v342
    %1091 = vmatprep.subr.mxu0 0.0
    %1092 = vmatpush1.msra.mxu0 %v343
    %1093 = vmatprep.subr.mxu0 0.0
    %1094 = vmatpush1.msra.mxu0 %v344
    %1095 = vmatprep.subr.mxu0 0.0
    %1096 = vmatpush1.msra.mxu0 %v345
    %1097 = vmatprep.subr.mxu0 0.0
    %1098 = vmatpush1.msra.mxu0 %v346
    %1099 = vmatprep.subr.mxu0 0.0
    %1100 = vmatpush1.msra.mxu0 %v347
    %1101 = vmatprep.subr.mxu0 0.0
    %1102 = vmatpush1.msra.mxu0 %v348
    %1103 = vmatprep.subr.mxu0 0.0
    %1104 = vmatpush1.msra.mxu0 %v349
    %1105 = vmatprep.subr.mxu0 0.0
    %1106 = vmatpush1.msra.mxu0 %v350
    %1107 = vmatprep.subr.mxu0 0.0
    %1108 = vmatpush1.msra.mxu0 %v351
    %1109 = vmatprep.subr.mxu0 0.0
    %1110 = vmatpush1.msra.mxu0 %v352
    %1111 = vmatprep.subr.mxu0 0.0
    %1112 = vmatpush1.msra.mxu0 %v353
    %1113 = vmatprep.subr.mxu0 0.0
    %1114 = vmatpush1.msra.mxu0 %v354
    %1115 = vmatprep.subr.mxu0 0.0
    %1116 = vmatpush1.msra.mxu0 %v355
    %1117 = vmatprep.subr.mxu0 0.0
    %1118 = vmatpush1.msra.mxu0 %v356
    %1119 = vmatprep.subr.mxu0 0.0
    %1120 = vmatpush1.msra.mxu0 %v357
    %1121 = vmatprep.subr.mxu0 0.0
    %1122 = vmatpush1.msra.mxu0 %v358
    %1123 = vmatprep.subr.mxu0 0.0
    %1124 = vmatpush1.msra.mxu0 %v359
    %1125 = vmatprep.subr.mxu0 0.0
    %1126 = vmatpush1.msra.mxu0 %v360
    %1127 = vmatprep.subr.mxu0 0.0
    %1128 = vmatpush1.msra.mxu0 %v361
    %1129 = vmatprep.subr.mxu0 0.0
    %1130 = vmatpush1.msra.mxu0 %v362
    %1131 = vmatprep.mubr.f32.mxu0 %v977
    %1132 = vmatmul.mubr.f32.gmra.mrb[0].mxu0 %v1066
    %v1133 = vpop.f32.mrb[0].mxu0
    %v1134 = vadd.f32 %v224, %v1133
    %v1135 = vpop.f32.mrb[0].mxu0
    %1136 = vdwg.mxu0
    %v1137 = vtanh.pop %v1134
    %v1138 = vxor.u32 %v1134, 2147483648
    %v1139 = vmul.f32 %v1138, 1.442695
    %v1140 = vpow.pop %v1139
    %v1141 = vadd.f32 %v1140, 1.0
    %v1142 = vrcp.pop %v1141
    %v1143 = vmul.f32 1.0, %v1142
    %v1144 = vsel %vm218, %v1137, %v1143
    %1145 = vrot.lane.b32.xlu0 %v1144, 64
    %v1146 = vpop.permute.xlu0 %1145
    %v1147 = vmul.f32 %v1144, %v1146
    %1148 = vrot.lane.b32.xlu0 %v1147, 32
    %v1149 = vpop.permute.xlu0 %1148
    %v1150 = vmul.f32 %v1144, %v975
    %v1151 = vadd.f32 %v1150, %v1149
    %v1152 = vtanh.pop %v1151
    %v1153 = vmul.f32 %v1146, %v1152
    %v1154 = vld [vmem:[#allocation2 + $0x28] sm:$0xff]
    %1155 = vmatprep.subr.mxu0 0.0
    %1156 = vmatpush1.msra.mxu0 %v227
    %1157 = vmatprep.subr.mxu0 0.0
    %1158 = vmatpush1.msra.mxu0 %v228
    %1159 = vmatprep.subr.mxu0 0.0
    %1160 = vmatpush1.msra.mxu0 %v229
    %1161 = vmatprep.subr.mxu0 0.0
    %1162 = vmatpush1.msra.mxu0 %v230
    %1163 = vmatprep.subr.mxu0 0.0
    %1164 = vmatpush1.msra.mxu0 %v231
    %1165 = vmatprep.subr.mxu0 0.0
    %1166 = vmatpush1.msra.mxu0 %v232
    %1167 = vmatprep.subr.mxu0 0.0
    %1168 = vmatpush1.msra.mxu0 %v233
    %1169 = vmatprep.subr.mxu0 0.0
    %1170 = vmatpush1.msra.mxu0 %v234
    %1171 = vmatprep.subr.mxu0 0.0
    %1172 = vmatpush1.msra.mxu0 %v235
    %1173 = vmatprep.subr.mxu0 0.0
    %1174 = vmatpush1.msra.mxu0 %v236
    %1175 = vmatprep.subr.mxu0 0.0
    %1176 = vmatpush1.msra.mxu0 %v237
    %1177 = vmatprep.subr.mxu0 0.0
    %1178 = vmatpush1.msra.mxu0 %v238
    %1179 = vmatprep.subr.mxu0 0.0
    %1180 = vmatpush1.msra.mxu0 %v239
    %1181 = vmatprep.subr.mxu0 0.0
    %1182 = vmatpush1.msra.mxu0 %v240
    %1183 = vmatprep.subr.mxu0 0.0
    %1184 = vmatpush1.msra.mxu0 %v241
    %1185 = vmatprep.subr.mxu0 0.0
    %1186 = vmatpush1.msra.mxu0 %v242
    %1187 = vmatprep.subr.mxu0 0.0
    %1188 = vmatpush1.msra.mxu0 0.0
    %1189 = vmatprep.subr.mxu0 0.0
    %1190 = vmatpush1.msra.mxu0 0.0
    %1191 = vmatprep.subr.mxu0 0.0
    %1192 = vmatpush1.msra.mxu0 0.0
    %1193 = vmatprep.subr.mxu0 0.0
    %1194 = vmatpush1.msra.mxu0 0.0
    %1195 = vmatprep.subr.mxu0 0.0
    %1196 = vmatpush1.msra.mxu0 0.0
    %1197 = vmatprep.subr.mxu0 0.0
    %1198 = vmatpush1.msra.mxu0 0.0
    %1199 = vmatprep.subr.mxu0 0.0
    %1200 = vmatpush1.msra.mxu0 0.0
    %1201 = vmatprep.subr.mxu0 0.0
    %1202 = vmatpush1.msra.mxu0 0.0
    %1203 = vmatprep.subr.mxu0 0.0
    %1204 = vmatpush1.msra.mxu0 0.0
    %1205 = vmatprep.subr.mxu0 0.0
    %1206 = vmatpush1.msra.mxu0 0.0
    %1207 = vmatprep.subr.mxu0 0.0
    %1208 = vmatpush1.msra.mxu0 0.0
    %1209 = vmatprep.subr.mxu0 0.0
    %1210 = vmatpush1.msra.mxu0 0.0
    %1211 = vmatprep.subr.mxu0 0.0
    %1212 = vmatpush1.msra.mxu0 0.0
    %1213 = vmatprep.subr.mxu0 0.0
    %1214 = vmatpush1.msra.mxu0 0.0
    %1215 = vmatprep.subr.mxu0 0.0
    %1216 = vmatpush1.msra.mxu0 0.0
    %1217 = vmatprep.subr.mxu0 0.0
    %1218 = vmatpush1.msra.mxu0 0.0
    %1219 = vmatprep.mubr.f32.mxu0 0.0
    %1220 = vmatmul.mubr.f32.gmra.mrb[0].mxu0 %v1066
    %v1221 = vpop.f32.mrb[0].mxu0
    %v1222 = vadd.f32 0.0, %v1221
    %v1223 = vpop.f32.mrb[0].mxu0
    %1224 = vdwg.mxu0
    %v1225 = vadd.f32 %v1154, %v1222
    %v1226 = vtanh.pop %v1225
    %v1227 = vxor.u32 %v1225, 2147483648
    %v1228 = vmul.f32 %v1227, 1.442695
    %v1229 = vpow.pop %v1228
    %v1230 = vadd.f32 %v1229, 1.0
    %v1231 = vrcp.pop %v1230
    %v1232 = vmul.f32 1.0, %v1231
    %v1233 = vsel %vm218, %v1226, %v1232
    %1234 = vrot.lane.b32.xlu0 %v1233, 64
    %v1235 = vpop.permute.xlu0 %1234
    %v1236 = vmul.f32 %v1233, %v1235
    %1237 = vrot.lane.b32.xlu0 %v1236, 32
    %v1238 = vpop.permute.xlu0 %1237
    %v1239 = vmul.f32 %v1233, %v1064
    %v1240 = vadd.f32 %v1239, %v1238
    %v1241 = vtanh.pop %v1240
    %v1242 = vmul.f32 %v1235, %v1241
    %1243 = vmatprep.subr.mxu0 0.0
    %1244 = vmatpush1.msra.mxu0 %v331
    %1245 = vmatprep.subr.mxu0 0.0
    %1246 = vmatpush1.msra.mxu0 %v332
    %1247 = vmatprep.subr.mxu0 0.0
    %1248 = vmatpush1.msra.mxu0 %v333
    %1249 = vmatprep.subr.mxu0 0.0
    %1250 = vmatpush1.msra.mxu0 %v334
    %1251 = vmatprep.subr.mxu0 0.0
    %1252 = vmatpush1.msra.mxu0 %v335
    %1253 = vmatprep.subr.mxu0 0.0
    %1254 = vmatpush1.msra.mxu0 %v336
    %1255 = vmatprep.subr.mxu0 0.0
    %1256 = vmatpush1.msra.mxu0 %v337
    %1257 = vmatprep.subr.mxu0 0.0
    %1258 = vmatpush1.msra.mxu0 %v338
    %1259 = vmatprep.subr.mxu0 0.0
    %1260 = vmatpush1.msra.mxu0 %v339
    %1261 = vmatprep.subr.mxu0 0.0
    %1262 = vmatpush1.msra.mxu0 %v340
    %1263 = vmatprep.subr.mxu0 0.0
    %1264 = vmatpush1.msra.mxu0 %v341
    %1265 = vmatprep.subr.mxu0 0.0
    %1266 = vmatpush1.msra.mxu0 %v342
    %1267 = vmatprep.subr.mxu0 0.0
    %1268 = vmatpush1.msra.mxu0 %v343
    %1269 = vmatprep.subr.mxu0 0.0
    %1270 = vmatpush1.msra.mxu0 %v344
    %1271 = vmatprep.subr.mxu0 0.0
    %1272 = vmatpush1.msra.mxu0 %v345
    %1273 = vmatprep.subr.mxu0 0.0
    %1274 = vmatpush1.msra.mxu0 %v346
    %1275 = vmatprep.subr.mxu0 0.0
    %1276 = vmatpush1.msra.mxu0 %v347
    %1277 = vmatprep.subr.mxu0 0.0
    %1278 = vmatpush1.msra.mxu0 %v348
    %1279 = vmatprep.subr.mxu0 0.0
    %1280 = vmatpush1.msra.mxu0 %v349
    %1281 = vmatprep.subr.mxu0 0.0
    %1282 = vmatpush1.msra.mxu0 %v350
    %1283 = vmatprep.subr.mxu0 0.0
    %1284 = vmatpush1.msra.mxu0 %v351
    %1285 = vmatprep.subr.mxu0 0.0
    %1286 = vmatpush1.msra.mxu0 %v352
    %1287 = vmatprep.subr.mxu0 0.0
    %1288 = vmatpush1.msra.mxu0 %v353
    %1289 = vmatprep.subr.mxu0 0.0
    %1290 = vmatpush1.msra.mxu0 %v354
    %1291 = vmatprep.subr.mxu0 0.0
    %1292 = vmatpush1.msra.mxu0 %v355
    %1293 = vmatprep.subr.mxu0 0.0
    %1294 = vmatpush1.msra.mxu0 %v356
    %1295 = vmatprep.subr.mxu0 0.0
    %1296 = vmatpush1.msra.mxu0 %v357
    %1297 = vmatprep.subr.mxu0 0.0
    %1298 = vmatpush1.msra.mxu0 %v358
    %1299 = vmatprep.subr.mxu0 0.0
    %1300 = vmatpush1.msra.mxu0 %v359
    %1301 = vmatprep.subr.mxu0 0.0
    %1302 = vmatpush1.msra.mxu0 %v360
    %1303 = vmatprep.subr.mxu0 0.0
    %1304 = vmatpush1.msra.mxu0 %v361
    %1305 = vmatprep.subr.mxu0 0.0
    %1306 = vmatpush1.msra.mxu0 %v362
    %1307 = vmatprep.mubr.f32.mxu0 %v1153
    %1308 = vmatmul.mubr.f32.gmra.mrb[0].mxu0 %v1242
    %v1309 = vpop.f32.mrb[0].mxu0
    %v1310 = vadd.f32 %v224, %v1309
    %v1311 = vpop.f32.mrb[0].mxu0
    %1312 = vdwg.mxu0
    %v1313 = vtanh.pop %v1310
    %v1314 = vxor.u32 %v1310, 2147483648
    %v1315 = vmul.f32 %v1314, 1.442695
    %v1316 = vpow.pop %v1315
    %v1317 = vadd.f32 %v1316, 1.0
    %v1318 = vrcp.pop %v1317
    %v1319 = vmul.f32 1.0, %v1318
    %v1320 = vsel %vm218, %v1313, %v1319
    %1321 = vrot.lane.b32.xlu0 %v1320, 64
    %v1322 = vpop.permute.xlu0 %1321
    %v1323 = vmul.f32 %v1320, %v1322
    %1324 = vrot.lane.b32.xlu0 %v1323, 32
    %v1325 = vpop.permute.xlu0 %1324
    %v1326 = vmul.f32 %v1320, %v1151
    %v1327 = vadd.f32 %v1326, %v1325
    %v1328 = vtanh.pop %v1327
    %v1329 = vmul.f32 %v1322, %v1328
    %v1330 = vld [vmem:[#allocation2 + $0x30] sm:$0xff]
    %1331 = vmatprep.subr.mxu0 0.0
    %1332 = vmatpush1.msra.mxu0 %v227
    %1333 = vmatprep.subr.mxu0 0.0
    %1334 = vmatpush1.msra.mxu0 %v228
    %1335 = vmatprep.subr.mxu0 0.0
    %1336 = vmatpush1.msra.mxu0 %v229
    %1337 = vmatprep.subr.mxu0 0.0
    %1338 = vmatpush1.msra.mxu0 %v230
    %1339 = vmatprep.subr.mxu0 0.0
    %1340 = vmatpush1.msra.mxu0 %v231
    %1341 = vmatprep.subr.mxu0 0.0
    %1342 = vmatpush1.msra.mxu0 %v232
    %1343 = vmatprep.subr.mxu0 0.0
    %1344 = vmatpush1.msra.mxu0 %v233
    %1345 = vmatprep.subr.mxu0 0.0
    %1346 = vmatpush1.msra.mxu0 %v234
    %1347 = vmatprep.subr.mxu0 0.0
    %1348 = vmatpush1.msra.mxu0 %v235
    %1349 = vmatprep.subr.mxu0 0.0
    %1350 = vmatpush1.msra.mxu0 %v236
    %1351 = vmatprep.subr.mxu0 0.0
    %1352 = vmatpush1.msra.mxu0 %v237
    %1353 = vmatprep.subr.mxu0 0.0
    %1354 = vmatpush1.msra.mxu0 %v238
    %1355 = vmatprep.subr.mxu0 0.0
    %1356 = vmatpush1.msra.mxu0 %v239
    %1357 = vmatprep.subr.mxu0 0.0
    %1358 = vmatpush1.msra.mxu0 %v240
    %1359 = vmatprep.subr.mxu0 0.0
    %1360 = vmatpush1.msra.mxu0 %v241
    %1361 = vmatprep.subr.mxu0 0.0
    %1362 = vmatpush1.msra.mxu0 %v242
    %1363 = vmatprep.subr.mxu0 0.0
    %1364 = vmatpush1.msra.mxu0 0.0
    %1365 = vmatprep.subr.mxu0 0.0
    %1366 = vmatpush1.msra.mxu0 0.0
    %1367 = vmatprep.subr.mxu0 0.0
    %1368 = vmatpush1.msra.mxu0 0.0
    %1369 = vmatprep.subr.mxu0 0.0
    %1370 = vmatpush1.msra.mxu0 0.0
    %1371 = vmatprep.subr.mxu0 0.0
    %1372 = vmatpush1.msra.mxu0 0.0
    %1373 = vmatprep.subr.mxu0 0.0
    %1374 = vmatpush1.msra.mxu0 0.0
    %1375 = vmatprep.subr.mxu0 0.0
    %1376 = vmatpush1.msra.mxu0 0.0
    %1377 = vmatprep.subr.mxu0 0.0
    %1378 = vmatpush1.msra.mxu0 0.0
    %1379 = vmatprep.subr.mxu0 0.0
    %1380 = vmatpush1.msra.mxu0 0.0
    %1381 = vmatprep.subr.mxu0 0.0
    %1382 = vmatpush1.msra.mxu0 0.0
    %1383 = vmatprep.subr.mxu0 0.0
    %1384 = vmatpush1.msra.mxu0 0.0
    %1385 = vmatprep.subr.mxu0 0.0
    %1386 = vmatpush1.msra.mxu0 0.0
    %1387 = vmatprep.subr.mxu0 0.0
    %1388 = vmatpush1.msra.mxu0 0.0
    %1389 = vmatprep.subr.mxu0 0.0
    %1390 = vmatpush1.msra.mxu0 0.0
    %1391 = vmatprep.subr.mxu0 0.0
    %1392 = vmatpush1.msra.mxu0 0.0
    %1393 = vmatprep.subr.mxu0 0.0
    %1394 = vmatpush1.msra.mxu0 0.0
    %1395 = vmatprep.mubr.f32.mxu0 0.0
    %1396 = vmatmul.mubr.f32.gmra.mrb[0].mxu0 %v1242
    %v1397 = vpop.f32.mrb[0].mxu0
    %v1398 = vadd.f32 0.0, %v1397
    %v1399 = vpop.f32.mrb[0].mxu0
    %1400 = vdwg.mxu0
    %v1401 = vadd.f32 %v1330, %v1398
    %v1402 = vtanh.pop %v1401
    %v1403 = vxor.u32 %v1401, 2147483648
    %v1404 = vmul.f32 %v1403, 1.442695
    %v1405 = vpow.pop %v1404
    %v1406 = vadd.f32 %v1405, 1.0
    %v1407 = vrcp.pop %v1406
    %v1408 = vmul.f32 1.0, %v1407
    %v1409 = vsel %vm218, %v1402, %v1408
    %1410 = vrot.lane.b32.xlu0 %v1409, 64
    %v1411 = vpop.permute.xlu0 %1410
    %v1412 = vmul.f32 %v1409, %v1411
    %1413 = vrot.lane.b32.xlu0 %v1412, 32
    %v1414 = vpop.permute.xlu0 %1413
    %v1415 = vmul.f32 %v1409, %v1240
    %v1416 = vadd.f32 %v1415, %v1414
    %v1417 = vtanh.pop %v1416
    %v1418 = vmul.f32 %v1411, %v1417
    %1419 = vmatprep.subr.mxu0 0.0
    %1420 = vmatpush1.msra.mxu0 %v331
    %1421 = vmatprep.subr.mxu0 0.0
    %1422 = vmatpush1.msra.mxu0 %v332
    %1423 = vmatprep.subr.mxu0 0.0
    %1424 = vmatpush1.msra.mxu0 %v333
    %1425 = vmatprep.subr.mxu0 0.0
    %1426 = vmatpush1.msra.mxu0 %v334
    %1427 = vmatprep.subr.mxu0 0.0
    %1428 = vmatpush1.msra.mxu0 %v335
    %1429 = vmatprep.subr.mxu0 0.0
    %1430 = vmatpush1.msra.mxu0 %v336
    %1431 = vmatprep.subr.mxu0 0.0
    %1432 = vmatpush1.msra.mxu0 %v337
    %1433 = vmatprep.subr.mxu0 0.0
    %1434 = vmatpush1.msra.mxu0 %v338
    %1435 = vmatprep.subr.mxu0 0.0
    %1436 = vmatpush1.msra.mxu0 %v339
    %1437 = vmatprep.subr.mxu0 0.0
    %1438 = vmatpush1.msra.mxu0 %v340
    %1439 = vmatprep.subr.mxu0 0.0
    %1440 = vmatpush1.msra.mxu0 %v341
    %1441 = vmatprep.subr.mxu0 0.0
    %1442 = vmatpush1.msra.mxu0 %v342
    %1443 = vmatprep.subr.mxu0 0.0
    %1444 = vmatpush1.msra.mxu0 %v343
    %1445 = vmatprep.subr.mxu0 0.0
    %1446 = vmatpush1.msra.mxu0 %v344
    %1447 = vmatprep.subr.mxu0 0.0
    %1448 = vmatpush1.msra.mxu0 %v345
    %1449 = vmatprep.subr.mxu0 0.0
    %1450 = vmatpush1.msra.mxu0 %v346
    %1451 = vmatprep.subr.mxu0 0.0
    %1452 = vmatpush1.msra.mxu0 %v347
    %1453 = vmatprep.subr.mxu0 0.0
    %1454 = vmatpush1.msra.mxu0 %v348
    %1455 = vmatprep.subr.mxu0 0.0
    %1456 = vmatpush1.msra.mxu0 %v349
    %1457 = vmatprep.subr.mxu0 0.0
    %1458 = vmatpush1.msra.mxu0 %v350
    %1459 = vmatprep.subr.mxu0 0.0
    %1460 = vmatpush1.msra.mxu0 %v351
    %1461 = vmatprep.subr.mxu0 0.0
    %1462 = vmatpush1.msra.mxu0 %v352
    %1463 = vmatprep.subr.mxu0 0.0
    %1464 = vmatpush1.msra.mxu0 %v353
    %1465 = vmatprep.subr.mxu0 0.0
    %1466 = vmatpush1.msra.mxu0 %v354
    %1467 = vmatprep.subr.mxu0 0.0
    %1468 = vmatpush1.msra.mxu0 %v355
    %1469 = vmatprep.subr.mxu0 0.0
    %1470 = vmatpush1.msra.mxu0 %v356
    %1471 = vmatprep.subr.mxu0 0.0
    %1472 = vmatpush1.msra.mxu0 %v357
    %1473 = vmatprep.subr.mxu0 0.0
    %1474 = vmatpush1.msra.mxu0 %v358
    %1475 = vmatprep.subr.mxu0 0.0
    %1476 = vmatpush1.msra.mxu0 %v359
    %1477 = vmatprep.subr.mxu0 0.0
    %1478 = vmatpush1.msra.mxu0 %v360
    %1479 = vmatprep.subr.mxu0 0.0
    %1480 = vmatpush1.msra.mxu0 %v361
    %1481 = vmatprep.subr.mxu0 0.0
    %1482 = vmatpush1.msra.mxu0 %v362
    %1483 = vmatprep.mubr.f32.mxu0 %v1329
    %1484 = vmatmul.mubr.f32.gmra.mrb[0].mxu0 %v1418
    %v1485 = vpop.f32.mrb[0].mxu0
    %v1486 = vadd.f32 %v224, %v1485
    %v1487 = vpop.f32.mrb[0].mxu0
    %1488 = vdwg.mxu0
    %v1489 = vtanh.pop %v1486
    %v1490 = vxor.u32 %v1486, 2147483648
    %v1491 = vmul.f32 %v1490, 1.442695
    %v1492 = vpow.pop %v1491
    %v1493 = vadd.f32 %v1492, 1.0
    %v1494 = vrcp.pop %v1493
    %v1495 = vmul.f32 1.0, %v1494
    %v1496 = vsel %vm218, %v1489, %v1495
    %1497 = vrot.lane.b32.xlu0 %v1496, 64
    %v1498 = vpop.permute.xlu0 %1497
    %v1499 = vmul.f32 %v1496, %v1498
    %1500 = vrot.lane.b32.xlu0 %v1499, 32
    %v1501 = vpop.permute.xlu0 %1500
    %v1502 = vmul.f32 %v1496, %v1327
    %v1503 = vadd.f32 %v1502, %v1501
    %v1504 = vtanh.pop %v1503
    %v1505 = vmul.f32 %v1498, %v1504
    %v1506 = vld [vmem:[#allocation2 + $0x38] sm:$0xff]
    %1507 = vmatprep.subr.mxu0 0.0
    %1508 = vmatpush1.msra.mxu0 %v227
    %1509 = vmatprep.subr.mxu0 0.0
    %1510 = vmatpush1.msra.mxu0 %v228
    %1511 = vmatprep.subr.mxu0 0.0
    %1512 = vmatpush1.msra.mxu0 %v229
    %1513 = vmatprep.subr.mxu0 0.0
    %1514 = vmatpush1.msra.mxu0 %v230
    %1515 = vmatprep.subr.mxu0 0.0
    %1516 = vmatpush1.msra.mxu0 %v231
    %1517 = vmatprep.subr.mxu0 0.0
    %1518 = vmatpush1.msra.mxu0 %v232
    %1519 = vmatprep.subr.mxu0 0.0
    %1520 = vmatpush1.msra.mxu0 %v233
    %1521 = vmatprep.subr.mxu0 0.0
    %1522 = vmatpush1.msra.mxu0 %v234
    %1523 = vmatprep.subr.mxu0 0.0
    %1524 = vmatpush1.msra.mxu0 %v235
    %1525 = vmatprep.subr.mxu0 0.0
    %1526 = vmatpush1.msra.mxu0 %v236
    %1527 = vmatprep.subr.mxu0 0.0
    %1528 = vmatpush1.msra.mxu0 %v237
    %1529 = vmatprep.subr.mxu0 0.0
    %1530 = vmatpush1.msra.mxu0 %v238
    %1531 = vmatprep.subr.mxu0 0.0
    %1532 = vmatpush1.msra.mxu0 %v239
    %1533 = vmatprep.subr.mxu0 0.0
    %1534 = vmatpush1.msra.mxu0 %v240
    %1535 = vmatprep.subr.mxu0 0.0
    %1536 = vmatpush1.msra.mxu0 %v241
    %1537 = vmatprep.subr.mxu0 0.0
    %1538 = vmatpush1.msra.mxu0 %v242
    %1539 = vmatprep.subr.mxu0 0.0
    %1540 = vmatpush1.msra.mxu0 0.0
    %1541 = vmatprep.subr.mxu0 0.0
    %1542 = vmatpush1.msra.mxu0 0.0
    %1543 = vmatprep.subr.mxu0 0.0
    %1544 = vmatpush1.msra.mxu0 0.0
    %1545 = vmatprep.subr.mxu0 0.0
    %1546 = vmatpush1.msra.mxu0 0.0
    %1547 = vmatprep.subr.mxu0 0.0
    %1548 = vmatpush1.msra.mxu0 0.0
    %1549 = vmatprep.subr.mxu0 0.0
    %1550 = vmatpush1.msra.mxu0 0.0
    %1551 = vmatprep.subr.mxu0 0.0
    %1552 = vmatpush1.msra.mxu0 0.0
    %1553 = vmatprep.subr.mxu0 0.0
    %1554 = vmatpush1.msra.mxu0 0.0
    %1555 = vmatprep.subr.mxu0 0.0
    %1556 = vmatpush1.msra.mxu0 0.0
    %1557 = vmatprep.subr.mxu0 0.0
    %1558 = vmatpush1.msra.mxu0 0.0
    %1559 = vmatprep.subr.mxu0 0.0
    %1560 = vmatpush1.msra.mxu0 0.0
    %1561 = vmatprep.subr.mxu0 0.0
    %1562 = vmatpush1.msra.mxu0 0.0
    %1563 = vmatprep.subr.mxu0 0.0
    %1564 = vmatpush1.msra.mxu0 0.0
    %1565 = vmatprep.subr.mxu0 0.0
    %1566 = vmatpush1.msra.mxu0 0.0
    %1567 = vmatprep.subr.mxu0 0.0
    %1568 = vmatpush1.msra.mxu0 0.0
    %1569 = vmatprep.subr.mxu0 0.0
    %1570 = vmatpush1.msra.mxu0 0.0
    %1571 = vmatprep.mubr.f32.mxu0 0.0
    %1572 = vmatmul.mubr.f32.gmra.mrb[0].mxu0 %v1418
    %v1573 = vpop.f32.mrb[0].mxu0
    %v1574 = vadd.f32 0.0, %v1573
    %v1575 = vpop.f32.mrb[0].mxu0
    %1576 = vdwg.mxu0
    %v1577 = vadd.f32 %v1506, %v1574
    %v1578 = vtanh.pop %v1577
    %v1579 = vxor.u32 %v1577, 2147483648
    %v1580 = vmul.f32 %v1579, 1.442695
    %v1581 = vpow.pop %v1580
    %v1582 = vadd.f32 %v1581, 1.0
    %v1583 = vrcp.pop %v1582
    %v1584 = vmul.f32 1.0, %v1583
    %v1585 = vsel %vm218, %v1578, %v1584
    %1586 = vrot.lane.b32.xlu0 %v1585, 64
    %v1587 = vpop.permute.xlu0 %1586
    %v1588 = vmul.f32 %v1585, %v1587
    %1589 = vrot.lane.b32.xlu0 %v1588, 32
    %v1590 = vpop.permute.xlu0 %1589
    %v1591 = vmul.f32 %v1585, %v1416
    %v1592 = vadd.f32 %v1591, %v1590
    %v1593 = vtanh.pop %v1592
    %v1594 = vmul.f32 %v1587, %v1593
    %1595 = vmatprep.subr.mxu0 0.0
    %1596 = vmatpush1.msra.mxu0 %v331
    %1597 = vmatprep.subr.mxu0 0.0
    %1598 = vmatpush1.msra.mxu0 %v332
    %1599 = vmatprep.subr.mxu0 0.0
    %1600 = vmatpush1.msra.mxu0 %v333
    %1601 = vmatprep.subr.mxu0 0.0
    %1602 = vmatpush1.msra.mxu0 %v334
    %1603 = vmatprep.subr.mxu0 0.0
    %1604 = vmatpush1.msra.mxu0 %v335
    %1605 = vmatprep.subr.mxu0 0.0
    %1606 = vmatpush1.msra.mxu0 %v336
    %1607 = vmatprep.subr.mxu0 0.0
    %1608 = vmatpush1.msra.mxu0 %v337
    %1609 = vmatprep.subr.mxu0 0.0
    %1610 = vmatpush1.msra.mxu0 %v338
    %1611 = vmatprep.subr.mxu0 0.0
    %1612 = vmatpush1.msra.mxu0 %v339
    %1613 = vmatprep.subr.mxu0 0.0
    %1614 = vmatpush1.msra.mxu0 %v340
    %1615 = vmatprep.subr.mxu0 0.0
    %1616 = vmatpush1.msra.mxu0 %v341
    %1617 = vmatprep.subr.mxu0 0.0
    %1618 = vmatpush1.msra.mxu0 %v342
    %1619 = vmatprep.subr.mxu0 0.0
    %1620 = vmatpush1.msra.mxu0 %v343
    %1621 = vmatprep.subr.mxu0 0.0
    %1622 = vmatpush1.msra.mxu0 %v344
    %1623 = vmatprep.subr.mxu0 0.0
    %1624 = vmatpush1.msra.mxu0 %v345
    %1625 = vmatprep.subr.mxu0 0.0
    %1626 = vmatpush1.msra.mxu0 %v346
    %1627 = vmatprep.subr.mxu0 0.0
    %1628 = vmatpush1.msra.mxu0 %v347
    %1629 = vmatprep.subr.mxu0 0.0
    %1630 = vmatpush1.msra.mxu0 %v348
    %1631 = vmatprep.subr.mxu0 0.0
    %1632 = vmatpush1.msra.mxu0 %v349
    %1633 = vmatprep.subr.mxu0 0.0
    %1634 = vmatpush1.msra.mxu0 %v350
    %1635 = vmatprep.subr.mxu0 0.0
    %1636 = vmatpush1.msra.mxu0 %v351
    %1637 = vmatprep.subr.mxu0 0.0
    %1638 = vmatpush1.msra.mxu0 %v352
    %1639 = vmatprep.subr.mxu0 0.0
    %1640 = vmatpush1.msra.mxu0 %v353
    %1641 = vmatprep.subr.mxu0 0.0
    %1642 = vmatpush1.msra.mxu0 %v354
    %1643 = vmatprep.subr.mxu0 0.0
    %1644 = vmatpush1.msra.mxu0 %v355
    %1645 = vmatprep.subr.mxu0 0.0
    %1646 = vmatpush1.msra.mxu0 %v356
    %1647 = vmatprep.subr.mxu0 0.0
    %1648 = vmatpush1.msra.mxu0 %v357
    %1649 = vmatprep.subr.mxu0 0.0
    %1650 = vmatpush1.msra.mxu0 %v358
    %1651 = vmatprep.subr.mxu0 0.0
    %1652 = vmatpush1.msra.mxu0 %v359
    %1653 = vmatprep.subr.mxu0 0.0
    %1654 = vmatpush1.msra.mxu0 %v360
    %1655 = vmatprep.subr.mxu0 0.0
    %1656 = vmatpush1.msra.mxu0 %v361
    %1657 = vmatprep.subr.mxu0 0.0
    %1658 = vmatpush1.msra.mxu0 %v362
    %1659 = vmatprep.mubr.f32.mxu0 %v1505
    %1660 = vmatmul.mubr.f32.gmra.mrb[0].mxu0 %v1594
    %v1661 = vpop.f32.mrb[0].mxu0
    %v1662 = vadd.f32 %v224, %v1661
    %v1663 = vpop.f32.mrb[0].mxu0
    %1664 = vdwg.mxu0
    %v1665 = vtanh.pop %v1662
    %v1666 = vxor.u32 %v1662, 2147483648
    %v1667 = vmul.f32 %v1666, 1.442695
    %v1668 = vpow.pop %v1667
    %v1669 = vadd.f32 %v1668, 1.0
    %v1670 = vrcp.pop %v1669
    %v1671 = vmul.f32 1.0, %v1670
    %v1672 = vsel %vm218, %v1665, %v1671
    %1673 = vrot.lane.b32.xlu0 %v1672, 64
    %v1674 = vpop.permute.xlu0 %1673
    %v1675 = vmul.f32 %v1672, %v1674
    %1676 = vrot.lane.b32.xlu0 %v1675, 32
    %v1677 = vpop.permute.xlu0 %1676
    %v1678 = vmul.f32 %v1672, %v1503
    %v1679 = vadd.f32 %v1678, %v1677
    %v1680 = vtanh.pop %v1679
    %v1681 = vmul.f32 %v1674, %v1680
    %v1682 = vld [vmem:[#allocation7] sm:$0xff]
    %v1683 = vld [vmem:[#allocation7 + $0x8] sm:$0xff]
    %v1684 = vld [vmem:[#allocation7 + $0x10] sm:$0xff]
    %v1685 = vld [vmem:[#allocation7 + $0x18] sm:$0xff]
    %v1686 = vld [vmem:[#allocation7 + $0x20] sm:$0xff]
    %v1687 = vld [vmem:[#allocation7 + $0x28] sm:$0xff]
    %v1688 = vld [vmem:[#allocation7 + $0x30] sm:$0xff]
    %v1689 = vld [vmem:[#allocation7 + $0x38] sm:$0xff]
    %v1690 = vld [vmem:[#allocation7 + $0x40] sm:$0xff]
    %v1691 = vld [vmem:[#allocation7 + $0x48] sm:$0xff]
    %v1692 = vld [vmem:[#allocation7 + $0x50] sm:$0xff]
    %v1693 = vld [vmem:[#allocation7 + $0x58] sm:$0xff]
    %v1694 = vld [vmem:[#allocation7 + $0x60] sm:$0xff]
    %v1695 = vld [vmem:[#allocation7 + $0x68] sm:$0xff]
    %v1696 = vld [vmem:[#allocation7 + $0x70] sm:$0xff]
    %v1697 = vld [vmem:[#allocation7 + $0x78] sm:$0xff]
    %v1698 = vld [vmem:[%s7] sm:$0x1]
    %v1700 = vlaneseq
    %v1701 = vshrl.u32 %v1700, 7
    %v1702 = vsub.s32 0, %v1701
    %v1703 = vrot.slane %v1698, %v1702
    %1705 = vmatprep.subr.mxu0 0.0
    %1706 = vmatpush1.msra.mxu0 %v1682
    %1707 = vmatprep.subr.mxu0 0.0
    %1708 = vmatpush1.msra.mxu0 %v1683
    %1709 = vmatprep.subr.mxu0 0.0
    %1710 = vmatpush1.msra.mxu0 %v1684
    %1711 = vmatprep.subr.mxu0 0.0
    %1712 = vmatpush1.msra.mxu0 %v1685
    %1713 = vmatprep.subr.mxu0 0.0
    %1714 = vmatpush1.msra.mxu0 %v1686
    %1715 = vmatprep.subr.mxu0 0.0
    %1716 = vmatpush1.msra.mxu0 %v1687
    %1717 = vmatprep.subr.mxu0 0.0
    %1718 = vmatpush1.msra.mxu0 %v1688
    %1719 = vmatprep.subr.mxu0 0.0
    %1720 = vmatpush1.msra.mxu0 %v1689
    %1721 = vmatprep.subr.mxu0 0.0
    %1722 = vmatpush1.msra.mxu0 %v1690
    %1723 = vmatprep.subr.mxu0 0.0
    %1724 = vmatpush1.msra.mxu0 %v1691
    %1725 = vmatprep.subr.mxu0 0.0
    %1726 = vmatpush1.msra.mxu0 %v1692
    %1727 = vmatprep.subr.mxu0 0.0
    %1728 = vmatpush1.msra.mxu0 %v1693
    %1729 = vmatprep.subr.mxu0 0.0
    %1730 = vmatpush1.msra.mxu0 %v1694
    %1731 = vmatprep.subr.mxu0 0.0
    %1732 = vmatpush1.msra.mxu0 %v1695
    %1733 = vmatprep.subr.mxu0 0.0
    %1734 = vmatpush1.msra.mxu0 %v1696
    %1735 = vmatprep.subr.mxu0 0.0
    %1736 = vmatpush1.msra.mxu0 %v1697
    %1737 = vmatprep.subr.mxu0 0.0
    %1738 = vmatpush1.msra.mxu0 0.0
    %1739 = vmatprep.subr.mxu0 0.0
    %1740 = vmatpush1.msra.mxu0 0.0
    %1741 = vmatprep.subr.mxu0 0.0
    %1742 = vmatpush1.msra.mxu0 0.0
    %1743 = vmatprep.subr.mxu0 0.0
    %1744 = vmatpush1.msra.mxu0 0.0
    %1745 = vmatprep.subr.mxu0 0.0
    %1746 = vmatpush1.msra.mxu0 0.0
    %1747 = vmatprep.subr.mxu0 0.0
    %1748 = vmatpush1.msra.mxu0 0.0
    %1749 = vmatprep.subr.mxu0 0.0
    %1750 = vmatpush1.msra.mxu0 0.0
    %1751 = vmatprep.subr.mxu0 0.0
    %1752 = vmatpush1.msra.mxu0 0.0
    %1753 = vmatprep.subr.mxu0 0.0
    %1754 = vmatpush1.msra.mxu0 0.0
    %1755 = vmatprep.subr.mxu0 0.0
    %1756 = vmatpush1.msra.mxu0 0.0
    %1757 = vmatprep.subr.mxu0 0.0
    %1758 = vmatpush1.msra.mxu0 0.0
    %1759 = vmatprep.subr.mxu0 0.0
    %1760 = vmatpush1.msra.mxu0 0.0
    %1761 = vmatprep.subr.mxu0 0.0
    %1762 = vmatpush1.msra.mxu0 0.0
    %1763 = vmatprep.subr.mxu0 0.0
    %1764 = vmatpush1.msra.mxu0 0.0
    %1765 = vmatprep.subr.mxu0 0.0
    %1766 = vmatpush1.msra.mxu0 0.0
    %1767 = vmatprep.subr.mxu0 0.0
    %1768 = vmatpush1.msra.mxu0 0.0
    %1769 = vmatprep.mubr.f32.mxu0 0.0
    %1770 = vmatmul.mubr.f32.gmra.mrb[0].mxu0 %v1681
    %v1771 = vpop.f32.mrb[0].mxu0
    %v1772 = vadd.f32 %v1703, %v1771
    %v1773 = vpop.f32.mrb[0].mxu0
    %1774 = vdwg.mxu0
    %1775 = vst [vmem:[%s8] sm:$0xff] %v1772
    // Predicated region
    $region46: #{lstm_forecaster_forward.1} parent=1 // pred_check
      _
    $region47: #{lstm_forecaster_forward.1} parent=1 // pred_check_branch
      %1777 = sbr.rel (0) target = $region49
    $region48: #{lstm_forecaster_forward.1} parent=1 // pred_region
      _
    $region49: #{lstm_forecaster_forward.1} parent=1 // pred_fallthru
      _
    // Predicated region
    $region50: #{lstm_forecaster_forward.1} parent=1 // pred_check
      _
    $region51: #{lstm_forecaster_forward.1} parent=1 // pred_check_branch
      %1779 = sbr.rel (0) target = $region53
    $region52: #{lstm_forecaster_forward.1} parent=1 // pred_region
      _
    $region53: #{lstm_forecaster_forward.1} parent=1 // pred_fallthru
      _
    %1780 = vsyncpa [#allocation4], 1
    %1781 = vsyncpa [#allocation6], 1

</llo_original>
